<compile_context>
chip_gen: v5e
topology: v5e:2x2
jax: 0.10.0
libtpu: 0.0.40
codegen_flags: <defaults>
</compile_context>

<pallas_src>
import jax
import jax.numpy as jnp
from jax import lax
from jax.experimental import pallas as pl
from jax.experimental.pallas import tpu as pltpu

K1, K2, K3 = 24, 16, 8       # conv kernel sizes
C1, C2, C3 = 32, 64, 96      # conv output channels
C3_PAD = 128                 # conv3 output channels padded to a full lane vreg


def _single_encoder_kernel(x_ref, w1_ref, b1_ref, w2_ref, b2_ref,
                           w3_ref, b3_ref, o_ref):
    """Fused conv1->relu->conv2->relu->conv3->relu->global-max (time-in-lanes).

      x_ref  : (bb, C_in, L)       VMEM  raw input block (PyTorch NCL layout)
      wN_ref : (C_outN, KN*C_inN)  VMEM  flattened weights (resident)
      bN_ref : (C_outN, 1)         VMEM  f32 biases
      o_ref  : (bb, 128)           VMEM  lane-dense output (channels 96..127 = 0)
    """
    bb, _c_in, L = x_ref.shape
    L1 = L - K1 + 1
    L2 = L1 - K2 + 1
    L3 = L2 - K3 + 1
    mm_dtype = w1_ref.dtype          # bf16 operands by default, f32 accumulate

    def im2col(h, ksize, out_len):
        # (C, T) -> (ksize*C, out_len); row index = k*C + c (tap outer,
        # channel inner).  Tap-shifted lane slices stacked along sublanes.
        return jnp.concatenate([h[:, k:k + out_len] for k in range(ksize)],
                               axis=0)

    def conv_relu(patches, w_ref, b_ref):
        # One MXU matmul per conv layer: (C_out, K*C_in) @ (K*C_in, T).
        y = jnp.dot(w_ref[...], patches.astype(mm_dtype),
                    preferred_element_type=jnp.float32)
        return jnp.maximum(y + b_ref[...], 0.0)

    def body(b, carry):
        x = x_ref[b].astype(jnp.float32)                       # (C_in, L)
        h1 = conv_relu(im2col(x, K1, L1), w1_ref, b1_ref)      # (32, L1)
        h2 = conv_relu(im2col(h1, K2, L2), w2_ref, b2_ref)     # (64, L2)
        h3 = conv_relu(im2col(h2, K3, L3), w3_ref, b3_ref)     # (128, L3)
        # AdaptiveMaxPool1d(1): global max over time (cross-lane reduce).
        o_ref[pl.ds(b, 1), :] = jnp.max(h3, axis=-1)[None, :]  # (1, 128)
        return carry

    lax.fori_loop(0, bb, body, 0)


def single_encoder_forward(x_ncl, params, *, block_b=8,
                           matmul_dtype=jnp.bfloat16,
                           vmem_limit_bytes=48 * 1024 * 1024):
    """x_ncl: (B, C_in, L) float32 (PyTorch NCL layout).  Returns (B, 96) f32.

    block_b: batch samples per grid step.  On v7x (2 TensorCores) pick
    block_b <= B/2 (multiple of 8) so the grid has >= 2 parallel steps; on
    v5e/v6e (128 MiB VMEM, 1 TC) it can be raised to 16-32.
    matmul_dtype=jnp.bfloat16 uses bf16 MXU operands with f32 accumulation
    (~2x MXU rate on v6e/v7x, half the input DMA); pass jnp.float32 for
    near-bit-accurate results.
    """
    B, c_in, L = x_ncl.shape
    w1, b1, w2, b2, w3, b3 = params
    L1 = L - K1 + 1
    L2 = L1 - K2 + 1
    L3 = L2 - K3 + 1
    assert L3 >= 1, "sequence too short for the conv stack"

    # Flatten weights once: (K, C_in, C_out) -> (C_out, K*C_in), tap outer.
    w1f = w1.reshape(K1 * c_in, C1).T.astype(matmul_dtype)
    w2f = w2.reshape(K2 * C1, C2).T.astype(matmul_dtype)
    w3f = jnp.pad(w3.reshape(K3 * C2, C3).T,
                  ((0, C3_PAD - C3), (0, 0))).astype(matmul_dtype)
    b1c = b1.reshape(C1, 1)
    b2c = b2.reshape(C2, 1)
    b3c = jnp.pad(b3.reshape(C3, 1), ((0, C3_PAD - C3), (0, 0)))

    x = x_ncl.astype(matmul_dtype)

    # Batch blocking; (8,128) rule: bb == (padded) B or bb a multiple of 8.
    if B <= block_b:
        bb, b_pad = B, B
    else:
        bb = max(8, (block_b // 8) * 8)
        b_pad = ((B + bb - 1) // bb) * bb
        if b_pad != B:
            x = jnp.pad(x, ((0, b_pad - B), (0, 0), (0, 0)))

    flops = 2 * b_pad * (L1 * (K1 * c_in) * C1
                         + L2 * (K2 * C1) * C2
                         + L3 * (K3 * C2) * C3_PAD)
    itemsize = jnp.dtype(matmul_dtype).itemsize
    bytes_accessed = (b_pad * c_in * L * itemsize
                      + (w1f.size + w2f.size + w3f.size) * itemsize
                      + (b1c.size + b2c.size + b3c.size) * 4
                      + b_pad * C3_PAD * 4)

    out = pl.pallas_call(
        _single_encoder_kernel,
        out_shape=jax.ShapeDtypeStruct((b_pad, C3_PAD), jnp.float32),
        grid=(b_pad // bb,),
        in_specs=[
            pl.BlockSpec((bb, c_in, L), lambda i: (i, 0, 0)),
            pl.BlockSpec((C1, K1 * c_in), lambda i: (0, 0)),
            pl.BlockSpec((C1, 1), lambda i: (0, 0)),
            pl.BlockSpec((C2, K2 * C1), lambda i: (0, 0)),
            pl.BlockSpec((C2, 1), lambda i: (0, 0)),
            pl.BlockSpec((C3_PAD, K3 * C2), lambda i: (0, 0)),
            pl.BlockSpec((C3_PAD, 1), lambda i: (0, 0)),
        ],
        out_specs=pl.BlockSpec((bb, C3_PAD), lambda i: (i, 0)),
        compiler_params=pltpu.CompilerParams(
            dimension_semantics=("parallel",),
            vmem_limit_bytes=vmem_limit_bytes),
        cost_estimate=pl.CostEstimate(
            flops=flops, transcendentals=0, bytes_accessed=bytes_accessed),
    )(x, w1f, b1c, w2f, b2c, w3f, b3c)

    return out[:B, :C3]


def _init_conv_params(key, c_in, c_out, ksize):
    """PyTorch-Conv1d-like init (uniform +-1/sqrt(fan_in)).

    Weight layout used here: (ksize, c_in, c_out)."""
    kw, kb = jax.random.split(key)
    bound = 1.0 / jnp.sqrt(c_in * ksize)
    w = jax.random.uniform(kw, (ksize, c_in, c_out), jnp.float32, -bound, bound)
    b = jax.random.uniform(kb, (1, c_out), jnp.float32, -bound, bound)
    return w, b


class DynamicEncoderPallas:
    """JAX/Pallas equivalent of Dynamic_Encoder."""

    def __init__(self, num_modalities, dim_lists, key):
        self.num_modalities = num_modalities
        self.params = []
        for idx in range(num_modalities):
            c_in = len(dim_lists[idx])
            k0, k1, k2, key = jax.random.split(key, 4)
            w1, b1 = _init_conv_params(k0, c_in, C1, K1)
            w2, b2 = _init_conv_params(k1, C1, C2, K2)
            w3, b3 = _init_conv_params(k2, C2, C3, K3)
            self.params.append((w1, b1, w2, b2, w3, b3))

    def forward(self, input_list, *, matmul_dtype=jnp.bfloat16):
        """input_list[idx]: (B, C_in_idx, L) float32 (PyTorch NCL layout)."""
        feature_lists = []
        for idx in range(self.num_modalities):
            feature_lists.append(
                single_encoder_forward(input_list[idx], self.params[idx],
                                       matmul_dtype=matmul_dtype))
        return feature_lists


def _reference_single_encoder(x_ncl, params):
    """Pure-JAX reference (lax conv) for correctness checking."""
    w1, b1, w2, b2, w3, b3 = params

    def conv_relu(h, w, b):
        # h: (B, C_in, L); w: (k, C_in, C_out) -> lax wants (C_out, C_in, k)
        w_oik = jnp.transpose(w, (2, 1, 0))
        y = jax.lax.conv_general_dilated(
            h, w_oik, window_strides=(1,), padding="VALID",
            dimension_numbers=("NCH", "OIH", "NCH"))
        return jnp.maximum(y + b[0][None, :, None], 0.0)

    h = conv_relu(x_ncl, w1, b1)
    h = conv_relu(h, w2, b2)
    h = conv_relu(h, w3, b3)
    return jnp.max(h, axis=-1)            # (B, 96)


if __name__ == "__main__":
    key = jax.random.PRNGKey(0)

    # Small synthetic problem: 2 modalities, channel dims from dim_lists.
    num_modalities = 2
    dim_lists = [[0], [0, 1]]             # -> C_in = 1 and 2
    B, L = 2, 64                          # L must be >= 24+16+8-2 = 46

    k_model, k_x0, k_x1 = jax.random.split(key, 3)
    model = DynamicEncoderPallas(num_modalities, dim_lists, k_model)

    input_list = [
        jax.random.normal(k_x0, (B, len(dim_lists[0]), L), jnp.float32),
        jax.random.normal(k_x1, (B, len(dim_lists[1]), L), jnp.float32),
    ]

    # Default path: bf16 MXU operands, f32 accumulation (loose tolerance).
    feats = model.forward(input_list)
    feats = [jax.block_until_ready(f) for f in feats]
    for idx in range(num_modalities):
        ref = _reference_single_encoder(input_list[idx], model.params[idx])
        assert feats[idx].shape == (B, C3)
        assert jnp.allclose(feats[idx], ref, atol=3e-2, rtol=3e-2), (
            f"modality {idx} mismatch (bf16 path)")

    # f32 path: near-bit-accurate check of the same kernel structure.
    for idx in range(num_modalities):
        out32 = single_encoder_forward(input_list[idx], model.params[idx],
                                       matmul_dtype=jnp.float32)
        out32 = jax.block_until_ready(out32)
        ref = _reference_single_encoder(input_list[idx], model.params[idx])
        assert jnp.allclose(out32, ref, atol=1e-4, rtol=1e-4), (
            f"modality {idx} mismatch (f32 path)")

    print("KERNEL_OK")
</pallas_src>

<mosaic_0001>
module attributes {stable_mosaic.version = 11 : i64} {
  func.func @_single_encoder_kernel(%arg0: i32, %arg1: memref<2x1x64xbf16, #tpu.memory_space<vmem>>, %arg2: memref<32x24xbf16, #tpu.memory_space<vmem>>, %arg3: memref<32x1xf32, #tpu.memory_space<vmem>>, %arg4: memref<64x512xbf16, #tpu.memory_space<vmem>>, %arg5: memref<64x1xf32, #tpu.memory_space<vmem>>, %arg6: memref<128x512xbf16, #tpu.memory_space<vmem>>, %arg7: memref<128x1xf32, #tpu.memory_space<vmem>>, %arg8: memref<2x128xf32, #tpu.memory_space<vmem>>) attributes {dimension_semantics = [#tpu.dimension_semantics<parallel>], iteration_bounds = array<i64: 1>, scalar_prefetch = 0 : i64, scratch_operands = 0 : i64, tpu.core_type = #tpu.core_type<tc>, window_params = [{transform_indices = @transform_0, window_bounds = array<i64: 2, 1, 64>}, {pipeline_mode = #tpu.pipeline_mode<synchronous>, transform_indices = @transform_1, window_bounds = array<i64: 32, 24>}, {pipeline_mode = #tpu.pipeline_mode<synchronous>, transform_indices = @transform_2, window_bounds = array<i64: 32, 1>}, {pipeline_mode = #tpu.pipeline_mode<synchronous>, transform_indices = @transform_3, window_bounds = array<i64: 64, 512>}, {pipeline_mode = #tpu.pipeline_mode<synchronous>, transform_indices = @transform_4, window_bounds = array<i64: 64, 1>}, {pipeline_mode = #tpu.pipeline_mode<synchronous>, transform_indices = @transform_5, window_bounds = array<i64: 128, 512>}, {pipeline_mode = #tpu.pipeline_mode<synchronous>, transform_indices = @transform_6, window_bounds = array<i64: 128, 1>}, {transform_indices = @transform_7, window_bounds = array<i64: 2, 128>}]} {
    %c0_i32 = arith.constant 0 : i32
    %c2_i32 = arith.constant 2 : i32
    %0 = arith.addi %c0_i32, %c2_i32 : i32
    %c1_i32 = arith.constant 1 : i32
    scf.for %arg9 = %c0_i32 to %0 step %c1_i32  : i32 {
      %1 = arith.index_cast %arg9 : i32 to index
      %c0 = arith.constant 0 : index
      %c0_1 = arith.constant 0 : index
      %2 = vector.load %arg1[%1, %c0, %c0_1] : memref<2x1x64xbf16, #tpu.memory_space<vmem>>, vector<1x1x64xbf16>
      %3 = vector.shape_cast %2 : vector<1x1x64xbf16> to vector<1x64xbf16>
      %4 = arith.extf %3 : vector<1x64xbf16> to vector<1x64xf32>
      %5 = vector.extract_strided_slice %4 {offsets = [0, 0], sizes = [1, 41], strides = [1, 1]} : vector<1x64xf32> to vector<1x41xf32>
      %6 = vector.extract_strided_slice %4 {offsets = [0, 1], sizes = [1, 41], strides = [1, 1]} : vector<1x64xf32> to vector<1x41xf32>
      %7 = vector.extract_strided_slice %4 {offsets = [0, 2], sizes = [1, 41], strides = [1, 1]} : vector<1x64xf32> to vector<1x41xf32>
      %8 = vector.extract_strided_slice %4 {offsets = [0, 3], sizes = [1, 41], strides = [1, 1]} : vector<1x64xf32> to vector<1x41xf32>
      %9 = vector.extract_strided_slice %4 {offsets = [0, 4], sizes = [1, 41], strides = [1, 1]} : vector<1x64xf32> to vector<1x41xf32>
      %10 = vector.extract_strided_slice %4 {offsets = [0, 5], sizes = [1, 41], strides = [1, 1]} : vector<1x64xf32> to vector<1x41xf32>
      %11 = vector.extract_strided_slice %4 {offsets = [0, 6], sizes = [1, 41], strides = [1, 1]} : vector<1x64xf32> to vector<1x41xf32>
      %12 = vector.extract_strided_slice %4 {offsets = [0, 7], sizes = [1, 41], strides = [1, 1]} : vector<1x64xf32> to vector<1x41xf32>
      %13 = vector.extract_strided_slice %4 {offsets = [0, 8], sizes = [1, 41], strides = [1, 1]} : vector<1x64xf32> to vector<1x41xf32>
      %14 = vector.extract_strided_slice %4 {offsets = [0, 9], sizes = [1, 41], strides = [1, 1]} : vector<1x64xf32> to vector<1x41xf32>
      %15 = vector.extract_strided_slice %4 {offsets = [0, 10], sizes = [1, 41], strides = [1, 1]} : vector<1x64xf32> to vector<1x41xf32>
      %16 = vector.extract_strided_slice %4 {offsets = [0, 11], sizes = [1, 41], strides = [1, 1]} : vector<1x64xf32> to vector<1x41xf32>
      %17 = vector.extract_strided_slice %4 {offsets = [0, 12], sizes = [1, 41], strides = [1, 1]} : vector<1x64xf32> to vector<1x41xf32>
      %18 = vector.extract_strided_slice %4 {offsets = [0, 13], sizes = [1, 41], strides = [1, 1]} : vector<1x64xf32> to vector<1x41xf32>
      %19 = vector.extract_strided_slice %4 {offsets = [0, 14], sizes = [1, 41], strides = [1, 1]} : vector<1x64xf32> to vector<1x41xf32>
      %20 = vector.extract_strided_slice %4 {offsets = [0, 15], sizes = [1, 41], strides = [1, 1]} : vector<1x64xf32> to vector<1x41xf32>
      %21 = vector.extract_strided_slice %4 {offsets = [0, 16], sizes = [1, 41], strides = [1, 1]} : vector<1x64xf32> to vector<1x41xf32>
      %22 = vector.extract_strided_slice %4 {offsets = [0, 17], sizes = [1, 41], strides = [1, 1]} : vector<1x64xf32> to vector<1x41xf32>
      %23 = vector.extract_strided_slice %4 {offsets = [0, 18], sizes = [1, 41], strides = [1, 1]} : vector<1x64xf32> to vector<1x41xf32>
      %24 = vector.extract_strided_slice %4 {offsets = [0, 19], sizes = [1, 41], strides = [1, 1]} : vector<1x64xf32> to vector<1x41xf32>
      %25 = vector.extract_strided_slice %4 {offsets = [0, 20], sizes = [1, 41], strides = [1, 1]} : vector<1x64xf32> to vector<1x41xf32>
      %26 = vector.extract_strided_slice %4 {offsets = [0, 21], sizes = [1, 41], strides = [1, 1]} : vector<1x64xf32> to vector<1x41xf32>
      %27 = vector.extract_strided_slice %4 {offsets = [0, 22], sizes = [1, 41], strides = [1, 1]} : vector<1x64xf32> to vector<1x41xf32>
      %28 = vector.extract_strided_slice %4 {offsets = [0, 23], sizes = [1, 41], strides = [1, 1]} : vector<1x64xf32> to vector<1x41xf32>
      %29 = tpu.concatenate %5, %6, %7, %8, %9, %10, %11, %12, %13, %14, %15, %16, %17, %18, %19, %20 in 0 : vector<1x41xf32>, vector<1x41xf32>, vector<1x41xf32>, vector<1x41xf32>, vector<1x41xf32>, vector<1x41xf32>, vector<1x41xf32>, vector<1x41xf32>, vector<1x41xf32>, vector<1x41xf32>, vector<1x41xf32>, vector<1x41xf32>, vector<1x41xf32>, vector<1x41xf32>, vector<1x41xf32>, vector<1x41xf32> -> vector<16x41xf32>
      %30 = tpu.concatenate %21, %22, %23, %24, %25, %26, %27, %28 in 0 : vector<1x41xf32>, vector<1x41xf32>, vector<1x41xf32>, vector<1x41xf32>, vector<1x41xf32>, vector<1x41xf32>, vector<1x41xf32>, vector<1x41xf32> -> vector<8x41xf32>
      %31 = tpu.concatenate %29, %30 in 0 : vector<16x41xf32>, vector<8x41xf32> -> vector<24x41xf32>
      %c0_2 = arith.constant 0 : index
      %c0_3 = arith.constant 0 : index
      %32 = vector.load %arg2[%c0_2, %c0_3] : memref<32x24xbf16, #tpu.memory_space<vmem>>, vector<32x24xbf16>
      %33 = arith.truncf %31 : vector<24x41xf32> to vector<24x41xbf16>
      %cst = arith.constant dense<0.000000e+00> : vector<32x41xf32>
      %34 = tpu.matmul %32, %33, %cst {dimension_numbers = #tpu.dot_dimension_numbers<[1], [0], [0], [1], [0, 0, 1, 1], [], []>} : vector<32x24xbf16>, vector<24x41xbf16>, vector<32x41xf32> -> vector<32x41xf32>
      %c0_4 = arith.constant 0 : index
      %c0_5 = arith.constant 0 : index
      %35 = vector.load %arg3[%c0_4, %c0_5] : memref<32x1xf32, #tpu.memory_space<vmem>>, vector<32x1xf32>
      %36 = vector.broadcast %35 : vector<32x1xf32> to vector<32x41xf32>
      %37 = arith.addf %34, %36 : vector<32x41xf32>
      %cst_6 = arith.constant 0.000000e+00 : f32
      %38 = vector.broadcast %cst_6 : f32 to vector<32x41xf32>
      %39 = arith.maximumf %37, %38 : vector<32x41xf32>
      %40 = vector.extract_strided_slice %39 {offsets = [0, 0], sizes = [32, 26], strides = [1, 1]} : vector<32x41xf32> to vector<32x26xf32>
      %41 = vector.extract_strided_slice %39 {offsets = [0, 1], sizes = [32, 26], strides = [1, 1]} : vector<32x41xf32> to vector<32x26xf32>
      %42 = vector.extract_strided_slice %39 {offsets = [0, 2], sizes = [32, 26], strides = [1, 1]} : vector<32x41xf32> to vector<32x26xf32>
      %43 = vector.extract_strided_slice %39 {offsets = [0, 3], sizes = [32, 26], strides = [1, 1]} : vector<32x41xf32> to vector<32x26xf32>
      %44 = vector.extract_strided_slice %39 {offsets = [0, 4], sizes = [32, 26], strides = [1, 1]} : vector<32x41xf32> to vector<32x26xf32>
      %45 = vector.extract_strided_slice %39 {offsets = [0, 5], sizes = [32, 26], strides = [1, 1]} : vector<32x41xf32> to vector<32x26xf32>
      %46 = vector.extract_strided_slice %39 {offsets = [0, 6], sizes = [32, 26], strides = [1, 1]} : vector<32x41xf32> to vector<32x26xf32>
      %47 = vector.extract_strided_slice %39 {offsets = [0, 7], sizes = [32, 26], strides = [1, 1]} : vector<32x41xf32> to vector<32x26xf32>
      %48 = vector.extract_strided_slice %39 {offsets = [0, 8], sizes = [32, 26], strides = [1, 1]} : vector<32x41xf32> to vector<32x26xf32>
      %49 = vector.extract_strided_slice %39 {offsets = [0, 9], sizes = [32, 26], strides = [1, 1]} : vector<32x41xf32> to vector<32x26xf32>
      %50 = vector.extract_strided_slice %39 {offsets = [0, 10], sizes = [32, 26], strides = [1, 1]} : vector<32x41xf32> to vector<32x26xf32>
      %51 = vector.extract_strided_slice %39 {offsets = [0, 11], sizes = [32, 26], strides = [1, 1]} : vector<32x41xf32> to vector<32x26xf32>
      %52 = vector.extract_strided_slice %39 {offsets = [0, 12], sizes = [32, 26], strides = [1, 1]} : vector<32x41xf32> to vector<32x26xf32>
      %53 = vector.extract_strided_slice %39 {offsets = [0, 13], sizes = [32, 26], strides = [1, 1]} : vector<32x41xf32> to vector<32x26xf32>
      %54 = vector.extract_strided_slice %39 {offsets = [0, 14], sizes = [32, 26], strides = [1, 1]} : vector<32x41xf32> to vector<32x26xf32>
      %55 = vector.extract_strided_slice %39 {offsets = [0, 15], sizes = [32, 26], strides = [1, 1]} : vector<32x41xf32> to vector<32x26xf32>
      %56 = tpu.concatenate %40, %41, %42, %43, %44, %45, %46, %47, %48, %49, %50, %51, %52, %53, %54, %55 in 0 : vector<32x26xf32>, vector<32x26xf32>, vector<32x26xf32>, vector<32x26xf32>, vector<32x26xf32>, vector<32x26xf32>, vector<32x26xf32>, vector<32x26xf32>, vector<32x26xf32>, vector<32x26xf32>, vector<32x26xf32>, vector<32x26xf32>, vector<32x26xf32>, vector<32x26xf32>, vector<32x26xf32>, vector<32x26xf32> -> vector<512x26xf32>
      %c0_7 = arith.constant 0 : index
      %c0_8 = arith.constant 0 : index
      %57 = vector.load %arg4[%c0_7, %c0_8] : memref<64x512xbf16, #tpu.memory_space<vmem>>, vector<64x512xbf16>
      %58 = arith.truncf %56 : vector<512x26xf32> to vector<512x26xbf16>
      %cst_9 = arith.constant dense<0.000000e+00> : vector<64x26xf32>
      %59 = tpu.matmul %57, %58, %cst_9 {dimension_numbers = #tpu.dot_dimension_numbers<[1], [0], [0], [1], [0, 0, 1, 1], [], []>} : vector<64x512xbf16>, vector<512x26xbf16>, vector<64x26xf32> -> vector<64x26xf32>
      %c0_10 = arith.constant 0 : index
      %c0_11 = arith.constant 0 : index
      %60 = vector.load %arg5[%c0_10, %c0_11] : memref<64x1xf32, #tpu.memory_space<vmem>>, vector<64x1xf32>
      %61 = vector.broadcast %60 : vector<64x1xf32> to vector<64x26xf32>
      %62 = arith.addf %59, %61 : vector<64x26xf32>
      %cst_12 = arith.constant 0.000000e+00 : f32
      %63 = vector.broadcast %cst_12 : f32 to vector<64x26xf32>
      %64 = arith.maximumf %62, %63 : vector<64x26xf32>
      %65 = vector.extract_strided_slice %64 {offsets = [0, 0], sizes = [64, 19], strides = [1, 1]} : vector<64x26xf32> to vector<64x19xf32>
      %66 = vector.extract_strided_slice %64 {offsets = [0, 1], sizes = [64, 19], strides = [1, 1]} : vector<64x26xf32> to vector<64x19xf32>
      %67 = vector.extract_strided_slice %64 {offsets = [0, 2], sizes = [64, 19], strides = [1, 1]} : vector<64x26xf32> to vector<64x19xf32>
      %68 = vector.extract_strided_slice %64 {offsets = [0, 3], sizes = [64, 19], strides = [1, 1]} : vector<64x26xf32> to vector<64x19xf32>
      %69 = vector.extract_strided_slice %64 {offsets = [0, 4], sizes = [64, 19], strides = [1, 1]} : vector<64x26xf32> to vector<64x19xf32>
      %70 = vector.extract_strided_slice %64 {offsets = [0, 5], sizes = [64, 19], strides = [1, 1]} : vector<64x26xf32> to vector<64x19xf32>
      %71 = vector.extract_strided_slice %64 {offsets = [0, 6], sizes = [64, 19], strides = [1, 1]} : vector<64x26xf32> to vector<64x19xf32>
      %72 = vector.extract_strided_slice %64 {offsets = [0, 7], sizes = [64, 19], strides = [1, 1]} : vector<64x26xf32> to vector<64x19xf32>
      %73 = tpu.concatenate %65, %66, %67, %68, %69, %70, %71, %72 in 0 : vector<64x19xf32>, vector<64x19xf32>, vector<64x19xf32>, vector<64x19xf32>, vector<64x19xf32>, vector<64x19xf32>, vector<64x19xf32>, vector<64x19xf32> -> vector<512x19xf32>
      %c0_13 = arith.constant 0 : index
      %c0_14 = arith.constant 0 : index
      %74 = vector.load %arg6[%c0_13, %c0_14] : memref<128x512xbf16, #tpu.memory_space<vmem>>, vector<128x512xbf16>
      %75 = arith.truncf %73 : vector<512x19xf32> to vector<512x19xbf16>
      %cst_15 = arith.constant dense<0.000000e+00> : vector<128x19xf32>
      %76 = tpu.matmul %74, %75, %cst_15 {dimension_numbers = #tpu.dot_dimension_numbers<[1], [0], [0], [1], [0, 0, 1, 1], [], []>} : vector<128x512xbf16>, vector<512x19xbf16>, vector<128x19xf32> -> vector<128x19xf32>
      %c0_16 = arith.constant 0 : index
      %c0_17 = arith.constant 0 : index
      %77 = vector.load %arg7[%c0_16, %c0_17] : memref<128x1xf32, #tpu.memory_space<vmem>>, vector<128x1xf32>
      %78 = vector.broadcast %77 : vector<128x1xf32> to vector<128x19xf32>
      %79 = arith.addf %76, %78 : vector<128x19xf32>
      %cst_18 = arith.constant 0.000000e+00 : f32
      %80 = vector.broadcast %cst_18 : f32 to vector<128x19xf32>
      %81 = arith.maximumf %79, %80 : vector<128x19xf32>
      %cst_19 = arith.constant dense<0xFF800000> : vector<128xf32>
      %82 = vector.multi_reduction <maximumf>, %81, %cst_19 [1] : vector<128x19xf32> to vector<128xf32>
      %83 = vector.shape_cast %82 : vector<128xf32> to vector<1x128xf32>
      %84 = arith.index_cast %arg9 : i32 to index
      %c0_20 = arith.constant 0 : index
      %85 = vector.load %arg8[%84, %c0_20] : memref<2x128xf32, #tpu.memory_space<vmem>>, vector<1x128xf32>
      tpu.vector_store %arg8[%84, %c0_20], %83 {strides = array<i32>} : memref<2x128xf32, #tpu.memory_space<vmem>>, vector<1x128xf32>,
    }
    %c2_i32_0 = arith.constant 2 : i32
    return
  }
  func.func @transform_0(%arg0: i32) -> (i32, i32, i32) {
    %c0_i32 = arith.constant 0 : i32
    %c0_i32_0 = arith.constant 0 : i32
    %c0_i32_1 = arith.constant 0 : i32
    return %arg0, %c0_i32, %c0_i32_0 : i32, i32, i32
  }
  func.func @transform_1(%arg0: i32) -> (i32, i32) {
    %c0_i32 = arith.constant 0 : i32
    %c0_i32_0 = arith.constant 0 : i32
    %c0_i32_1 = arith.constant 0 : i32
    return %c0_i32, %c0_i32_0 : i32, i32
  }
  func.func @transform_2(%arg0: i32) -> (i32, i32) {
    %c0_i32 = arith.constant 0 : i32
    %c0_i32_0 = arith.constant 0 : i32
    %c0_i32_1 = arith.constant 0 : i32
    return %c0_i32, %c0_i32_0 : i32, i32
  }
  func.func @transform_3(%arg0: i32) -> (i32, i32) {
    %c0_i32 = arith.constant 0 : i32
    %c0_i32_0 = arith.constant 0 : i32
    %c0_i32_1 = arith.constant 0 : i32
    return %c0_i32, %c0_i32_0 : i32, i32
  }
  func.func @transform_4(%arg0: i32) -> (i32, i32) {
    %c0_i32 = arith.constant 0 : i32
    %c0_i32_0 = arith.constant 0 : i32
    %c0_i32_1 = arith.constant 0 : i32
    return %c0_i32, %c0_i32_0 : i32, i32
  }
  func.func @transform_5(%arg0: i32) -> (i32, i32) {
    %c0_i32 = arith.constant 0 : i32
    %c0_i32_0 = arith.constant 0 : i32
    %c0_i32_1 = arith.constant 0 : i32
    return %c0_i32, %c0_i32_0 : i32, i32
  }
  func.func @transform_6(%arg0: i32) -> (i32, i32) {
    %c0_i32 = arith.constant 0 : i32
    %c0_i32_0 = arith.constant 0 : i32
    %c0_i32_1 = arith.constant 0 : i32
    return %c0_i32, %c0_i32_0 : i32, i32
  }
  func.func @transform_7(%arg0: i32) -> (i32, i32) {
    %c0_i32 = arith.constant 0 : i32
    %c0_i32_0 = arith.constant 0 : i32
    return %arg0, %c0_i32 : i32, i32
  }
}

</mosaic_0001>

<llo_original>
// kernel: tpu_custom_call.1
$region0: #{tpu_custom_call.1}
  #allocation0 [shape = 'u32[]', space=smem, size = 0x4, offset = 0x4, fixed_abs, tag = 'smem constant byte address 0x4 - core index']
  #allocation1 [shape = 'u32[72,128]{1,0:T(1,128)}', space=vmem, size = 0x9000, scoped, tag = 'internal scratch']
  %s0 = inlined_call_operand.vmem [shape: bf16[2,1,64], index: 0, kind: input, shape index: {}]
  %s1 = inlined_call_operand.vmem [shape: bf16[32,24], index: 1, kind: input, shape index: {}]
  %s2 = inlined_call_operand.vmem [shape: f32[32,1], index: 2, kind: input, shape index: {}]
  %s3 = inlined_call_operand.hbm [shape: bf16[64,512], index: 3, kind: input, shape index: {}]
  %s4 = inlined_call_operand.vmem [shape: f32[64,1], index: 4, kind: input, shape index: {}]
  %s5 = inlined_call_operand.vmem [shape: bf16[128,512], index: 5, kind: input, shape index: {}]
  %s6 = inlined_call_operand.vmem [shape: f32[128,1], index: 6, kind: input, shape index: {}]
  %s7 = inlined_call_operand.hbm [shape: f32[2,128], index: 7, kind: output, shape index: {}]
  %s8 = sld [smem:[#allocation0]]
  $region49: #{tpu_custom_call.1} parent=0
    _
  %s10 = ssub.s32 1, %s8
  %s11 = scalar_select 0, %s10, %s8
  $region1: #{tpu_custom_call.1} parent=0
    #allocation2 [shape = 'u8[65536]{0}', space=vmem, size = 0x10000, scoped, tag = 'input window, operand 3, single buffered']
    #allocation3 [shape = 's32[1]{0}', space=sflag, size = 0x4, scoped, tag = 'scoped memory for tpu_custom_call.1']
    #allocation4 [shape = 's32[1]{0}', space=sflag, size = 0x4, scoped, tag = 'scoped memory for tpu_custom_call.1']
    #allocation5 [shape = 'u8[1024]{0}', space=vmem, size = 0x400, scoped, tag = 'output window, operand 0, single buffered']
    %12 = vsyncpa [#allocation3], 0
    %13 = vsyncpa [#allocation4], 0
    // Predicated region
    $region2: #{tpu_custom_call.1} parent=1 // pred_check
      _
    $region3: #{tpu_custom_call.1} parent=1 // pred_check_branch
      %15 = sbr.rel (0) target = $region5
    $region4: #{tpu_custom_call.1} parent=1 // pred_region
      _
    $region5: #{tpu_custom_call.1} parent=1 // pred_fallthru
      _
    // Predicated region
    $region6: #{tpu_custom_call.1} parent=1 // pred_check
      _
    $region7: #{tpu_custom_call.1} parent=1 // pred_check_branch
      %17 = sbr.rel (0) target = $region9
    $region8: #{tpu_custom_call.1} parent=1 // pred_region
      _
    $region9: #{tpu_custom_call.1} parent=1 // pred_fallthru
      _
    // Predicated region
    $region10: #{tpu_custom_call.1} parent=1 // pred_check
      _
    $region11: #{tpu_custom_call.1} parent=1 // pred_check_branch
      %19 = sbr.rel (0) target = $region13
    $region12: #{tpu_custom_call.1} parent=1 // pred_region
      _
    $region13: #{tpu_custom_call.1} parent=1 // pred_fallthru
      _
    // Predicated region
    $region14: #{tpu_custom_call.1} parent=1 // pred_check
      _
    $region15: #{tpu_custom_call.1} parent=1 // pred_check_branch
      %21 = sbr.rel (0) target = $region17
    $region16: #{tpu_custom_call.1} parent=1 // pred_region
      %23 = vsyncadd [#allocation3], 0
      %s24 = sshll.u32 %s3, 4
      %s25 = int_to_ptr.hbm [resolvable:$true] %s24
      %s26 = sshll.u32 [#allocation2], 4
      %s27 = int_to_ptr.vmem [resolvable:$true] %s26
      %32 = dma.hbm_to_vmem [thread:$0]  %s25, 2048, %s27, [#allocation3], 256, 256, 16
    $region17: #{tpu_custom_call.1} parent=1 // pred_fallthru
      _
    // Predicated region
    $region18: #{tpu_custom_call.1} parent=1 // pred_check
      _
    $region19: #{tpu_custom_call.1} parent=1 // pred_check_branch
      %34 = sbr.rel (0) target = $region21
    $region20: #{tpu_custom_call.1} parent=1 // pred_region
      _
    $region21: #{tpu_custom_call.1} parent=1 // pred_fallthru
      _
    // Predicated region
    $region22: #{tpu_custom_call.1} parent=1 // pred_check
      _
    $region23: #{tpu_custom_call.1} parent=1 // pred_check_branch
      %36 = sbr.rel (0) target = $region25
    $region24: #{tpu_custom_call.1} parent=1 // pred_region
      _
    $region25: #{tpu_custom_call.1} parent=1 // pred_fallthru
      _
    // Predicated region
    $region26: #{tpu_custom_call.1} parent=1 // pred_check
      _
    $region27: #{tpu_custom_call.1} parent=1 // pred_check_branch
      %38 = sbr.rel (0) target = $region29
    $region28: #{tpu_custom_call.1} parent=1 // pred_region
      _
    $region29: #{tpu_custom_call.1} parent=1 // pred_fallthru
      _
    // Predicated region
    $region30: #{tpu_custom_call.1} parent=1 // pred_check
      _
    $region31: #{tpu_custom_call.1} parent=1 // pred_check_branch
      %40 = sbr.rel (0) target = $region33
    $region32: #{tpu_custom_call.1} parent=1 // pred_region
      %42 = dma.done [#allocation3], 2048
    $region33: #{tpu_custom_call.1} parent=1 // pred_fallthru
      _
    loop: start=0, step=1, limit=2
    $region34: #{tpu_custom_call.1} parent=1 // loop_pre_header
      _
    $region35: #{tpu_custom_call.1} parent=1 // loop_header
      %s45 = sphi 0, %s49
      %p46 = scmp.ge.s32.totalorder %s45, 2
    $region36: #{tpu_custom_call.1} parent=1 // loop_header_branch
      %48 = sbr.rel (%p46) target = $region40
    $region37: #{tpu_custom_call.1} parent=1 // loop_body
      %s50 = scalar_lea.vmem %s0, %s45
      %v51 = vld [vmem:[%s50] sm:$0x1]
      %v52 = vunpack.c.l.bf16 %v51
      %v54 = vperm.slane %v52, 0
      %55 = vrot.lane.b32.xlu0 %v54, 127
      %v56 = vpop.permute.xlu0 %55
      %58 = vrot.lane.b32.xlu0 %v54, 126
      %v59 = vpop.permute.xlu0 %58
      %61 = vrot.lane.b32.xlu0 %v54, 125
      %v62 = vpop.permute.xlu0 %61
      %64 = vrot.lane.b32.xlu0 %v54, 124
      %v65 = vpop.permute.xlu0 %64
      %67 = vrot.lane.b32.xlu0 %v54, 123
      %v68 = vpop.permute.xlu0 %67
      %70 = vrot.lane.b32.xlu0 %v54, 122
      %v71 = vpop.permute.xlu0 %70
      %73 = vrot.lane.b32.xlu0 %v54, 121
      %v74 = vpop.permute.xlu0 %73
      %76 = vrot.lane.b32.xlu0 %v54, 120
      %v77 = vpop.permute.xlu0 %76
      %79 = vrot.lane.b32.xlu0 %v54, 119
      %v80 = vpop.permute.xlu0 %79
      %82 = vrot.lane.b32.xlu0 %v54, 118
      %v83 = vpop.permute.xlu0 %82
      %85 = vrot.lane.b32.xlu0 %v54, 117
      %v86 = vpop.permute.xlu0 %85
      %88 = vrot.lane.b32.xlu0 %v54, 116
      %v89 = vpop.permute.xlu0 %88
      %91 = vrot.lane.b32.xlu0 %v54, 115
      %v92 = vpop.permute.xlu0 %91
      %94 = vrot.lane.b32.xlu0 %v54, 114
      %v95 = vpop.permute.xlu0 %94
      %97 = vrot.lane.b32.xlu0 %v54, 113
      %v98 = vpop.permute.xlu0 %97
      %vm100 = vcmask 1040384
      %v101 = vsel %vm100, %v52, %v56
      %vm102 = vcmask 1041408
      %v103 = vsel %vm102, %v101, %v59
      %vm104 = vcmask 1042432
      %v105 = vsel %vm104, %v103, %v62
      %vm106 = vcmask 1043456
      %v107 = vsel %vm106, %v105, %v65
      %vm108 = vcmask 1044480
      %v109 = vsel %vm108, %v107, %v68
      %vm110 = vcmask 1045504
      %v111 = vsel %vm110, %v109, %v71
      %vm112 = vcmask 1046528
      %v113 = vsel %vm112, %v111, %v74
      %v114 = vsel %vm100, %v77, %v80
      %v115 = vsel %vm102, %v114, %v83
      %v116 = vsel %vm104, %v115, %v86
      %v117 = vsel %vm106, %v116, %v89
      %v118 = vsel %vm108, %v117, %v92
      %v119 = vsel %vm110, %v118, %v95
      %v120 = vsel %vm112, %v119, %v98
      %122 = vrot.lane.b32.xlu0 %v113, 112
      %v123 = vpop.permute.xlu0 %122
      %v125 = vld [vmem:[%s1] sm:$0xf]
      %v126 = vld [vmem:[%s1 + $0x4] sm:$0xf]
      %v127 = vld [vmem:[%s1 + $0x8] sm:$0xf]
      %v128 = vld [vmem:[%s1 + $0xc] sm:$0xf]
      %v129 = vpack.c.bf16 %v120, %v113
      %v130 = vpack.c.bf16 %v123, %v123
      %v131 = vld [vmem:[%s2] sm:$0xff]
      %v132 = vld [vmem:[%s2 + $0x8] sm:$0xff]
      %v133 = vld [vmem:[%s2 + $0x10] sm:$0xff]
      %v134 = vld [vmem:[%s2 + $0x18] sm:$0xff]
      %136 = vset.pattern.permute.xlu0 0
      %137 = vperm.xlu0 %136, %v131
      %v138 = vpop.permute.xlu0 %137
      %141 = vset.pattern.permute.xlu0 0
      %142 = vperm.xlu0 %141, %v132
      %v143 = vpop.permute.xlu0 %142
      %146 = vset.pattern.permute.xlu0 0
      %147 = vperm.xlu0 %146, %v133
      %v148 = vpop.permute.xlu0 %147
      %151 = vset.pattern.permute.xlu0 0
      %152 = vperm.xlu0 %151, %v134
      %v153 = vpop.permute.xlu0 %152
      %v159 = vunpack.c.l.b16 %v125
      %v160 = vunpack.c.l.b16 %v126
      %v161 = vunpack.c.l.b16 %v127
      %v162 = vunpack.c.l.b16 %v128
      %v163 = vpack.c.b16 %v160, %v159
      %v164 = vpack.c.b16 %v162, %v161
      %vm165 = vcmask 195584
      %v167 = vsel %vm165, %v163, 0
      %v170 = vsel %vm165, %v164, 0
      %v173 = vsel %vm106, %v130, 0
      %175 = vmatpush.bf16.msra.mxu0 0
      %176 = vmatpush.bf16.msra.mxu0 0
      %177 = vmatpush.bf16.msra.mxu0 0
      %178 = vmatpush.bf16.msra.mxu0 0
      %179 = vmatpush.bf16.msra.mxu0 0
      %180 = vmatpush.bf16.msra.mxu0 0
      %181 = vmatpush.bf16.msra.mxu0 %v173
      %182 = vmatpush.bf16.msra.mxu0 %v129
      %183 = vmatmul.bf16.gmra.mxu0 %v167
      %v184 = vpop.f32.mrf.mxu0
      %v185 = vadd.f32 %v138, %v184
      %v186 = vpop.f32.mrf.mxu0
      %v187 = vadd.f32 %v143, %v186
      %188 = vmatmul.bf16.gmra.mxu0 %v170
      %v189 = vpop.f32.mrf.mxu0
      %v190 = vadd.f32 %v148, %v189
      %v191 = vpop.f32.mrf.mxu0
      %v192 = vadd.f32 %v153, %v191
      %193 = vdwg.mxu0
      %v194 = vmax.f32 %v185, 0.0
      %v195 = vmax.f32 %v187, 0.0
      %v196 = vmax.f32 %v190, 0.0
      %v197 = vmax.f32 %v192, 0.0
      %202 = vrot.lane.b32.xlu0 %v194, 127
      %v203 = vpop.permute.xlu0 %202
      %204 = vrot.lane.b32.xlu0 %v195, 127
      %v205 = vpop.permute.xlu0 %204
      %206 = vrot.lane.b32.xlu0 %v196, 127
      %v207 = vpop.permute.xlu0 %206
      %208 = vrot.lane.b32.xlu0 %v197, 127
      %v209 = vpop.permute.xlu0 %208
      %214 = vrot.lane.b32.xlu0 %v194, 126
      %v215 = vpop.permute.xlu0 %214
      %216 = vrot.lane.b32.xlu0 %v195, 126
      %v217 = vpop.permute.xlu0 %216
      %218 = vrot.lane.b32.xlu0 %v196, 126
      %v219 = vpop.permute.xlu0 %218
      %220 = vrot.lane.b32.xlu0 %v197, 126
      %v221 = vpop.permute.xlu0 %220
      %226 = vrot.lane.b32.xlu0 %v194, 125
      %v227 = vpop.permute.xlu0 %226
      %228 = vrot.lane.b32.xlu0 %v195, 125
      %v229 = vpop.permute.xlu0 %228
      %230 = vrot.lane.b32.xlu0 %v196, 125
      %v231 = vpop.permute.xlu0 %230
      %232 = vrot.lane.b32.xlu0 %v197, 125
      %v233 = vpop.permute.xlu0 %232
      %238 = vrot.lane.b32.xlu0 %v194, 124
      %v239 = vpop.permute.xlu0 %238
      %240 = vrot.lane.b32.xlu0 %v195, 124
      %v241 = vpop.permute.xlu0 %240
      %242 = vrot.lane.b32.xlu0 %v196, 124
      %v243 = vpop.permute.xlu0 %242
      %244 = vrot.lane.b32.xlu0 %v197, 124
      %v245 = vpop.permute.xlu0 %244
      %250 = vrot.lane.b32.xlu0 %v194, 123
      %v251 = vpop.permute.xlu0 %250
      %252 = vrot.lane.b32.xlu0 %v195, 123
      %v253 = vpop.permute.xlu0 %252
      %254 = vrot.lane.b32.xlu0 %v196, 123
      %v255 = vpop.permute.xlu0 %254
      %256 = vrot.lane.b32.xlu0 %v197, 123
      %v257 = vpop.permute.xlu0 %256
      %262 = vrot.lane.b32.xlu0 %v194, 122
      %v263 = vpop.permute.xlu0 %262
      %264 = vrot.lane.b32.xlu0 %v195, 122
      %v265 = vpop.permute.xlu0 %264
      %266 = vrot.lane.b32.xlu0 %v196, 122
      %v267 = vpop.permute.xlu0 %266
      %268 = vrot.lane.b32.xlu0 %v197, 122
      %v269 = vpop.permute.xlu0 %268
      %274 = vrot.lane.b32.xlu0 %v194, 121
      %v275 = vpop.permute.xlu0 %274
      %276 = vrot.lane.b32.xlu0 %v195, 121
      %v277 = vpop.permute.xlu0 %276
      %278 = vrot.lane.b32.xlu0 %v196, 121
      %v279 = vpop.permute.xlu0 %278
      %280 = vrot.lane.b32.xlu0 %v197, 121
      %v281 = vpop.permute.xlu0 %280
      %286 = vrot.lane.b32.xlu0 %v194, 120
      %v287 = vpop.permute.xlu0 %286
      %288 = vrot.lane.b32.xlu0 %v195, 120
      %v289 = vpop.permute.xlu0 %288
      %290 = vrot.lane.b32.xlu0 %v196, 120
      %v291 = vpop.permute.xlu0 %290
      %292 = vrot.lane.b32.xlu0 %v197, 120
      %v293 = vpop.permute.xlu0 %292
      %298 = vrot.lane.b32.xlu0 %v194, 119
      %v299 = vpop.permute.xlu0 %298
      %300 = vrot.lane.b32.xlu0 %v195, 119
      %v301 = vpop.permute.xlu0 %300
      %302 = vrot.lane.b32.xlu0 %v196, 119
      %v303 = vpop.permute.xlu0 %302
      %304 = vrot.lane.b32.xlu0 %v197, 119
      %v305 = vpop.permute.xlu0 %304
      %310 = vrot.lane.b32.xlu0 %v194, 118
      %v311 = vpop.permute.xlu0 %310
      %312 = vrot.lane.b32.xlu0 %v195, 118
      %v313 = vpop.permute.xlu0 %312
      %314 = vrot.lane.b32.xlu0 %v196, 118
      %v315 = vpop.permute.xlu0 %314
      %316 = vrot.lane.b32.xlu0 %v197, 118
      %v317 = vpop.permute.xlu0 %316
      %322 = vrot.lane.b32.xlu0 %v194, 117
      %v323 = vpop.permute.xlu0 %322
      %324 = vrot.lane.b32.xlu0 %v195, 117
      %v325 = vpop.permute.xlu0 %324
      %326 = vrot.lane.b32.xlu0 %v196, 117
      %v327 = vpop.permute.xlu0 %326
      %328 = vrot.lane.b32.xlu0 %v197, 117
      %v329 = vpop.permute.xlu0 %328
      %334 = vrot.lane.b32.xlu0 %v194, 116
      %v335 = vpop.permute.xlu0 %334
      %336 = vrot.lane.b32.xlu0 %v195, 116
      %v337 = vpop.permute.xlu0 %336
      %338 = vrot.lane.b32.xlu0 %v196, 116
      %v339 = vpop.permute.xlu0 %338
      %340 = vrot.lane.b32.xlu0 %v197, 116
      %v341 = vpop.permute.xlu0 %340
      %346 = vrot.lane.b32.xlu0 %v194, 115
      %v347 = vpop.permute.xlu0 %346
      %348 = vrot.lane.b32.xlu0 %v195, 115
      %v349 = vpop.permute.xlu0 %348
      %350 = vrot.lane.b32.xlu0 %v196, 115
      %v351 = vpop.permute.xlu0 %350
      %352 = vrot.lane.b32.xlu0 %v197, 115
      %v353 = vpop.permute.xlu0 %352
      %358 = vrot.lane.b32.xlu0 %v194, 114
      %v359 = vpop.permute.xlu0 %358
      %360 = vrot.lane.b32.xlu0 %v195, 114
      %v361 = vpop.permute.xlu0 %360
      %362 = vrot.lane.b32.xlu0 %v196, 114
      %v363 = vpop.permute.xlu0 %362
      %364 = vrot.lane.b32.xlu0 %v197, 114
      %v365 = vpop.permute.xlu0 %364
      %370 = vrot.lane.b32.xlu0 %v194, 113
      %v371 = vpop.permute.xlu0 %370
      %372 = vrot.lane.b32.xlu0 %v195, 113
      %v373 = vpop.permute.xlu0 %372
      %374 = vrot.lane.b32.xlu0 %v196, 113
      %v375 = vpop.permute.xlu0 %374
      %376 = vrot.lane.b32.xlu0 %v197, 113
      %v377 = vpop.permute.xlu0 %376
      %v382 = vld [vmem:[#allocation2] sm:$0xff]
      %v383 = vld [vmem:[#allocation2 + $0x8] sm:$0xff]
      %v384 = vld [vmem:[#allocation2 + $0x10] sm:$0xff]
      %v385 = vld [vmem:[#allocation2 + $0x18] sm:$0xff]
      %v386 = vld [vmem:[#allocation2 + $0x20] sm:$0xff]
      %v387 = vld [vmem:[#allocation2 + $0x28] sm:$0xff]
      %v388 = vld [vmem:[#allocation2 + $0x30] sm:$0xff]
      %v389 = vld [vmem:[#allocation2 + $0x38] sm:$0xff]
      %v390 = vld [vmem:[#allocation2 + $0x40] sm:$0xff]
      %v391 = vld [vmem:[#allocation2 + $0x48] sm:$0xff]
      %v392 = vld [vmem:[#allocation2 + $0x50] sm:$0xff]
      %v393 = vld [vmem:[#allocation2 + $0x58] sm:$0xff]
      %v394 = vld [vmem:[#allocation2 + $0x60] sm:$0xff]
      %v395 = vld [vmem:[#allocation2 + $0x68] sm:$0xff]
      %v396 = vld [vmem:[#allocation2 + $0x70] sm:$0xff]
      %v397 = vld [vmem:[#allocation2 + $0x78] sm:$0xff]
      %v398 = vpack.c.bf16 %v195, %v194
      %v399 = vpack.c.bf16 %v197, %v196
      %v400 = vpack.c.bf16 %v205, %v203
      %v401 = vpack.c.bf16 %v209, %v207
      %v402 = vpack.c.bf16 %v217, %v215
      %v403 = vpack.c.bf16 %v221, %v219
      %v404 = vpack.c.bf16 %v229, %v227
      %v405 = vpack.c.bf16 %v233, %v231
      %v406 = vpack.c.bf16 %v241, %v239
      %v407 = vpack.c.bf16 %v245, %v243
      %v408 = vpack.c.bf16 %v253, %v251
      %v409 = vpack.c.bf16 %v257, %v255
      %v410 = vpack.c.bf16 %v265, %v263
      %v411 = vpack.c.bf16 %v269, %v267
      %v412 = vpack.c.bf16 %v277, %v275
      %v413 = vpack.c.bf16 %v281, %v279
      %v414 = vpack.c.bf16 %v289, %v287
      %v415 = vpack.c.bf16 %v293, %v291
      %v416 = vpack.c.bf16 %v301, %v299
      %v417 = vpack.c.bf16 %v305, %v303
      %v418 = vpack.c.bf16 %v313, %v311
      %v419 = vpack.c.bf16 %v317, %v315
      %v420 = vpack.c.bf16 %v325, %v323
      %v421 = vpack.c.bf16 %v329, %v327
      %v422 = vpack.c.bf16 %v337, %v335
      %v423 = vpack.c.bf16 %v341, %v339
      %v424 = vpack.c.bf16 %v349, %v347
      %v425 = vpack.c.bf16 %v353, %v351
      %v426 = vpack.c.bf16 %v361, %v359
      %v427 = vpack.c.bf16 %v365, %v363
      %v428 = vpack.c.bf16 %v373, %v371
      %v429 = vpack.c.bf16 %v377, %v375
      %v430 = vld [vmem:[%s4] sm:$0xff]
      %v431 = vld [vmem:[%s4 + $0x8] sm:$0xff]
      %v432 = vld [vmem:[%s4 + $0x10] sm:$0xff]
      %v433 = vld [vmem:[%s4 + $0x18] sm:$0xff]
      %v434 = vld [vmem:[%s4 + $0x20] sm:$0xff]
      %v435 = vld [vmem:[%s4 + $0x28] sm:$0xff]
      %v436 = vld [vmem:[%s4 + $0x30] sm:$0xff]
      %v437 = vld [vmem:[%s4 + $0x38] sm:$0xff]
      %439 = vset.pattern.permute.xlu0 0
      %440 = vperm.xlu0 %439, %v430
      %v441 = vpop.permute.xlu0 %440
      %444 = vset.pattern.permute.xlu0 0
      %445 = vperm.xlu0 %444, %v431
      %v446 = vpop.permute.xlu0 %445
      %449 = vset.pattern.permute.xlu0 0
      %450 = vperm.xlu0 %449, %v432
      %v451 = vpop.permute.xlu0 %450
      %454 = vset.pattern.permute.xlu0 0
      %455 = vperm.xlu0 %454, %v433
      %v456 = vpop.permute.xlu0 %455
      %459 = vset.pattern.permute.xlu0 0
      %460 = vperm.xlu0 %459, %v434
      %v461 = vpop.permute.xlu0 %460
      %464 = vset.pattern.permute.xlu0 0
      %465 = vperm.xlu0 %464, %v435
      %v466 = vpop.permute.xlu0 %465
      %469 = vset.pattern.permute.xlu0 0
      %470 = vperm.xlu0 %469, %v436
      %v471 = vpop.permute.xlu0 %470
      %474 = vset.pattern.permute.xlu0 0
      %475 = vperm.xlu0 %474, %v437
      %v476 = vpop.permute.xlu0 %475
      %v494 = vunpack.c.l.b16 %v382
      %v495 = vunpack.c.h.b16 %v382
      %v496 = vunpack.c.l.b16 %v383
      %v497 = vunpack.c.h.b16 %v383
      %v498 = vunpack.c.l.b16 %v384
      %v499 = vunpack.c.h.b16 %v384
      %v500 = vunpack.c.l.b16 %v385
      %v501 = vunpack.c.h.b16 %v385
      %v502 = vunpack.c.l.b16 %v386
      %v503 = vunpack.c.h.b16 %v386
      %v504 = vunpack.c.l.b16 %v387
      %v505 = vunpack.c.h.b16 %v387
      %v506 = vunpack.c.l.b16 %v388
      %v507 = vunpack.c.h.b16 %v388
      %v508 = vunpack.c.l.b16 %v389
      %v509 = vunpack.c.h.b16 %v389
      %v510 = vunpack.c.l.b16 %v390
      %v511 = vunpack.c.h.b16 %v390
      %v512 = vunpack.c.l.b16 %v391
      %v513 = vunpack.c.h.b16 %v391
      %v514 = vunpack.c.l.b16 %v392
      %v515 = vunpack.c.h.b16 %v392
      %v516 = vunpack.c.l.b16 %v393
      %v517 = vunpack.c.h.b16 %v393
      %v518 = vunpack.c.l.b16 %v394
      %v519 = vunpack.c.h.b16 %v394
      %v520 = vunpack.c.l.b16 %v395
      %v521 = vunpack.c.h.b16 %v395
      %v522 = vunpack.c.l.b16 %v396
      %v523 = vunpack.c.h.b16 %v396
      %v524 = vunpack.c.l.b16 %v397
      %v525 = vunpack.c.h.b16 %v397
      %v526 = vpack.c.b16 %v498, %v494
      %v527 = vpack.c.b16 %v499, %v495
      %v528 = vpack.c.b16 %v500, %v496
      %v529 = vpack.c.b16 %v501, %v497
      %v530 = vpack.c.b16 %v506, %v502
      %v531 = vpack.c.b16 %v507, %v503
      %v532 = vpack.c.b16 %v508, %v504
      %v533 = vpack.c.b16 %v509, %v505
      %v534 = vpack.c.b16 %v514, %v510
      %v535 = vpack.c.b16 %v515, %v511
      %v536 = vpack.c.b16 %v516, %v512
      %v537 = vpack.c.b16 %v517, %v513
      %v538 = vpack.c.b16 %v522, %v518
      %v539 = vpack.c.b16 %v523, %v519
      %v540 = vpack.c.b16 %v524, %v520
      %v541 = vpack.c.b16 %v525, %v521
      %558 = vmatpush.bf16.msra.mxu0 %v405
      %559 = vmatpush.bf16.msra.mxu0 %v404
      %560 = vmatpush.bf16.msra.mxu0 %v403
      %561 = vmatpush.bf16.msra.mxu0 %v402
      %562 = vmatpush.bf16.msra.mxu0 %v401
      %563 = vmatpush.bf16.msra.mxu0 %v400
      %564 = vmatpush.bf16.msra.mxu0 %v399
      %565 = vmatpush.bf16.msra.mxu0 %v398
      %566 = vmatmul.bf16.gmra.mxu0 %v526
      %v567 = vpop.f32.mrf.mxu0
      %v568 = vadd.f32 %v441, %v567
      %v569 = vpop.f32.mrf.mxu0
      %v570 = vadd.f32 %v446, %v569
      %571 = vmatmul.bf16.gmra.mxu0 %v530
      %v572 = vpop.f32.mrf.mxu0
      %v573 = vadd.f32 %v451, %v572
      %v574 = vpop.f32.mrf.mxu0
      %v575 = vadd.f32 %v456, %v574
      %576 = vmatmul.bf16.gmra.mxu0 %v534
      %v577 = vpop.f32.mrf.mxu0
      %v578 = vadd.f32 %v461, %v577
      %v579 = vpop.f32.mrf.mxu0
      %v580 = vadd.f32 %v466, %v579
      %581 = vmatmul.bf16.gmra.mxu0 %v538
      %v582 = vpop.f32.mrf.mxu0
      %v583 = vadd.f32 %v471, %v582
      %v584 = vpop.f32.mrf.mxu0
      %v585 = vadd.f32 %v476, %v584
      %586 = vdwg.mxu0
      %587 = vmatpush.bf16.msra.mxu0 %v413
      %588 = vmatpush.bf16.msra.mxu0 %v412
      %589 = vmatpush.bf16.msra.mxu0 %v411
      %590 = vmatpush.bf16.msra.mxu0 %v410
      %591 = vmatpush.bf16.msra.mxu0 %v409
      %592 = vmatpush.bf16.msra.mxu0 %v408
      %593 = vmatpush.bf16.msra.mxu0 %v407
      %594 = vmatpush.bf16.msra.mxu0 %v406
      %595 = vmatmul.bf16.gmra.mxu0 %v527
      %v596 = vpop.f32.mrf.mxu0
      %v597 = vadd.f32 %v568, %v596
      %v598 = vpop.f32.mrf.mxu0
      %v599 = vadd.f32 %v570, %v598
      %600 = vmatmul.bf16.gmra.mxu0 %v531
      %v601 = vpop.f32.mrf.mxu0
      %v602 = vadd.f32 %v573, %v601
      %v603 = vpop.f32.mrf.mxu0
      %v604 = vadd.f32 %v575, %v603
      %605 = vmatmul.bf16.gmra.mxu0 %v535
      %v606 = vpop.f32.mrf.mxu0
      %v607 = vadd.f32 %v578, %v606
      %v608 = vpop.f32.mrf.mxu0
      %v609 = vadd.f32 %v580, %v608
      %610 = vmatmul.bf16.gmra.mxu0 %v539
      %v611 = vpop.f32.mrf.mxu0
      %v612 = vadd.f32 %v583, %v611
      %v613 = vpop.f32.mrf.mxu0
      %v614 = vadd.f32 %v585, %v613
      %615 = vdwg.mxu0
      %616 = vmatpush.bf16.msra.mxu0 %v421
      %617 = vmatpush.bf16.msra.mxu0 %v420
      %618 = vmatpush.bf16.msra.mxu0 %v419
      %619 = vmatpush.bf16.msra.mxu0 %v418
      %620 = vmatpush.bf16.msra.mxu0 %v417
      %621 = vmatpush.bf16.msra.mxu0 %v416
      %622 = vmatpush.bf16.msra.mxu0 %v415
      %623 = vmatpush.bf16.msra.mxu0 %v414
      %624 = vmatmul.bf16.gmra.mxu0 %v528
      %v625 = vpop.f32.mrf.mxu0
      %v626 = vadd.f32 %v597, %v625
      %v627 = vpop.f32.mrf.mxu0
      %v628 = vadd.f32 %v599, %v627
      %629 = vmatmul.bf16.gmra.mxu0 %v532
      %v630 = vpop.f32.mrf.mxu0
      %v631 = vadd.f32 %v602, %v630
      %v632 = vpop.f32.mrf.mxu0
      %v633 = vadd.f32 %v604, %v632
      %634 = vmatmul.bf16.gmra.mxu0 %v536
      %v635 = vpop.f32.mrf.mxu0
      %v636 = vadd.f32 %v607, %v635
      %v637 = vpop.f32.mrf.mxu0
      %v638 = vadd.f32 %v609, %v637
      %639 = vmatmul.bf16.gmra.mxu0 %v540
      %v640 = vpop.f32.mrf.mxu0
      %v641 = vadd.f32 %v612, %v640
      %v642 = vpop.f32.mrf.mxu0
      %v643 = vadd.f32 %v614, %v642
      %644 = vdwg.mxu0
      %645 = vmatpush.bf16.msra.mxu0 %v429
      %646 = vmatpush.bf16.msra.mxu0 %v428
      %647 = vmatpush.bf16.msra.mxu0 %v427
      %648 = vmatpush.bf16.msra.mxu0 %v426
      %649 = vmatpush.bf16.msra.mxu0 %v425
      %650 = vmatpush.bf16.msra.mxu0 %v424
      %651 = vmatpush.bf16.msra.mxu0 %v423
      %652 = vmatpush.bf16.msra.mxu0 %v422
      %653 = vmatmul.bf16.gmra.mxu0 %v529
      %v654 = vpop.f32.mrf.mxu0
      %v655 = vadd.f32 %v626, %v654
      %v656 = vpop.f32.mrf.mxu0
      %v657 = vadd.f32 %v628, %v656
      %658 = vmatmul.bf16.gmra.mxu0 %v533
      %v659 = vpop.f32.mrf.mxu0
      %v660 = vadd.f32 %v631, %v659
      %v661 = vpop.f32.mrf.mxu0
      %v662 = vadd.f32 %v633, %v661
      %663 = vmatmul.bf16.gmra.mxu0 %v537
      %v664 = vpop.f32.mrf.mxu0
      %v665 = vadd.f32 %v636, %v664
      %v666 = vpop.f32.mrf.mxu0
      %v667 = vadd.f32 %v638, %v666
      %668 = vmatmul.bf16.gmra.mxu0 %v541
      %v669 = vpop.f32.mrf.mxu0
      %v670 = vadd.f32 %v641, %v669
      %v671 = vpop.f32.mrf.mxu0
      %v672 = vadd.f32 %v643, %v671
      %673 = vdwg.mxu0
      %v674 = vmax.f32 %v655, 0.0
      %v675 = vmax.f32 %v657, 0.0
      %v676 = vmax.f32 %v660, 0.0
      %v677 = vmax.f32 %v662, 0.0
      %v678 = vmax.f32 %v665, 0.0
      %v679 = vmax.f32 %v667, 0.0
      %v680 = vmax.f32 %v670, 0.0
      %v681 = vmax.f32 %v672, 0.0
      %690 = vrot.lane.b32.xlu0 %v674, 127
      %v691 = vpop.permute.xlu0 %690
      %692 = vrot.lane.b32.xlu0 %v675, 127
      %v693 = vpop.permute.xlu0 %692
      %694 = vrot.lane.b32.xlu0 %v676, 127
      %v695 = vpop.permute.xlu0 %694
      %696 = vrot.lane.b32.xlu0 %v677, 127
      %v697 = vpop.permute.xlu0 %696
      %698 = vrot.lane.b32.xlu0 %v678, 127
      %v699 = vpop.permute.xlu0 %698
      %700 = vrot.lane.b32.xlu0 %v679, 127
      %v701 = vpop.permute.xlu0 %700
      %702 = vrot.lane.b32.xlu0 %v680, 127
      %v703 = vpop.permute.xlu0 %702
      %704 = vrot.lane.b32.xlu0 %v681, 127
      %v705 = vpop.permute.xlu0 %704
      %714 = vrot.lane.b32.xlu0 %v674, 126
      %v715 = vpop.permute.xlu0 %714
      %716 = vrot.lane.b32.xlu0 %v675, 126
      %v717 = vpop.permute.xlu0 %716
      %718 = vrot.lane.b32.xlu0 %v676, 126
      %v719 = vpop.permute.xlu0 %718
      %720 = vrot.lane.b32.xlu0 %v677, 126
      %v721 = vpop.permute.xlu0 %720
      %722 = vrot.lane.b32.xlu0 %v678, 126
      %v723 = vpop.permute.xlu0 %722
      %724 = vrot.lane.b32.xlu0 %v679, 126
      %v725 = vpop.permute.xlu0 %724
      %726 = vrot.lane.b32.xlu0 %v680, 126
      %v727 = vpop.permute.xlu0 %726
      %728 = vrot.lane.b32.xlu0 %v681, 126
      %v729 = vpop.permute.xlu0 %728
      %738 = vrot.lane.b32.xlu0 %v674, 125
      %v739 = vpop.permute.xlu0 %738
      %740 = vrot.lane.b32.xlu0 %v675, 125
      %v741 = vpop.permute.xlu0 %740
      %742 = vrot.lane.b32.xlu0 %v676, 125
      %v743 = vpop.permute.xlu0 %742
      %744 = vrot.lane.b32.xlu0 %v677, 125
      %v745 = vpop.permute.xlu0 %744
      %746 = vrot.lane.b32.xlu0 %v678, 125
      %v747 = vpop.permute.xlu0 %746
      %748 = vrot.lane.b32.xlu0 %v679, 125
      %v749 = vpop.permute.xlu0 %748
      %750 = vrot.lane.b32.xlu0 %v680, 125
      %v751 = vpop.permute.xlu0 %750
      %752 = vrot.lane.b32.xlu0 %v681, 125
      %v753 = vpop.permute.xlu0 %752
      %762 = vrot.lane.b32.xlu0 %v674, 124
      %v763 = vpop.permute.xlu0 %762
      %764 = vrot.lane.b32.xlu0 %v675, 124
      %v765 = vpop.permute.xlu0 %764
      %766 = vrot.lane.b32.xlu0 %v676, 124
      %v767 = vpop.permute.xlu0 %766
      %768 = vrot.lane.b32.xlu0 %v677, 124
      %v769 = vpop.permute.xlu0 %768
      %770 = vrot.lane.b32.xlu0 %v678, 124
      %v771 = vpop.permute.xlu0 %770
      %772 = vrot.lane.b32.xlu0 %v679, 124
      %v773 = vpop.permute.xlu0 %772
      %774 = vrot.lane.b32.xlu0 %v680, 124
      %v775 = vpop.permute.xlu0 %774
      %776 = vrot.lane.b32.xlu0 %v681, 124
      %v777 = vpop.permute.xlu0 %776
      %786 = vrot.lane.b32.xlu0 %v674, 123
      %v787 = vpop.permute.xlu0 %786
      %788 = vrot.lane.b32.xlu0 %v675, 123
      %v789 = vpop.permute.xlu0 %788
      %790 = vrot.lane.b32.xlu0 %v676, 123
      %v791 = vpop.permute.xlu0 %790
      %792 = vrot.lane.b32.xlu0 %v677, 123
      %v793 = vpop.permute.xlu0 %792
      %794 = vrot.lane.b32.xlu0 %v678, 123
      %v795 = vpop.permute.xlu0 %794
      %796 = vrot.lane.b32.xlu0 %v679, 123
      %v797 = vpop.permute.xlu0 %796
      %798 = vrot.lane.b32.xlu0 %v680, 123
      %v799 = vpop.permute.xlu0 %798
      %800 = vrot.lane.b32.xlu0 %v681, 123
      %v801 = vpop.permute.xlu0 %800
      %810 = vrot.lane.b32.xlu0 %v674, 122
      %v811 = vpop.permute.xlu0 %810
      %812 = vrot.lane.b32.xlu0 %v675, 122
      %v813 = vpop.permute.xlu0 %812
      %814 = vrot.lane.b32.xlu0 %v676, 122
      %v815 = vpop.permute.xlu0 %814
      %816 = vrot.lane.b32.xlu0 %v677, 122
      %v817 = vpop.permute.xlu0 %816
      %818 = vrot.lane.b32.xlu0 %v678, 122
      %v819 = vpop.permute.xlu0 %818
      %820 = vrot.lane.b32.xlu0 %v679, 122
      %v821 = vpop.permute.xlu0 %820
      %822 = vrot.lane.b32.xlu0 %v680, 122
      %v823 = vpop.permute.xlu0 %822
      %824 = vrot.lane.b32.xlu0 %v681, 122
      %v825 = vpop.permute.xlu0 %824
      %834 = vrot.lane.b32.xlu0 %v674, 121
      %v835 = vpop.permute.xlu0 %834
      %836 = vrot.lane.b32.xlu0 %v675, 121
      %v837 = vpop.permute.xlu0 %836
      %838 = vrot.lane.b32.xlu0 %v676, 121
      %v839 = vpop.permute.xlu0 %838
      %840 = vrot.lane.b32.xlu0 %v677, 121
      %v841 = vpop.permute.xlu0 %840
      %842 = vrot.lane.b32.xlu0 %v678, 121
      %v843 = vpop.permute.xlu0 %842
      %844 = vrot.lane.b32.xlu0 %v679, 121
      %v845 = vpop.permute.xlu0 %844
      %846 = vrot.lane.b32.xlu0 %v680, 121
      %v847 = vpop.permute.xlu0 %846
      %848 = vrot.lane.b32.xlu0 %v681, 121
      %v849 = vpop.permute.xlu0 %848
      %v858 = vld [vmem:[%s5] sm:$0xff]
      %v859 = vld [vmem:[%s5 + $0x8] sm:$0xff]
      %v860 = vld [vmem:[%s5 + $0x10] sm:$0xff]
      %v861 = vld [vmem:[%s5 + $0x18] sm:$0xff]
      %v862 = vld [vmem:[%s5 + $0x20] sm:$0xff]
      %v863 = vld [vmem:[%s5 + $0x28] sm:$0xff]
      %v864 = vld [vmem:[%s5 + $0x30] sm:$0xff]
      %v865 = vld [vmem:[%s5 + $0x38] sm:$0xff]
      %v866 = vld [vmem:[%s5 + $0x40] sm:$0xff]
      %v867 = vld [vmem:[%s5 + $0x48] sm:$0xff]
      %v868 = vld [vmem:[%s5 + $0x50] sm:$0xff]
      %v869 = vld [vmem:[%s5 + $0x58] sm:$0xff]
      %v870 = vld [vmem:[%s5 + $0x60] sm:$0xff]
      %v871 = vld [vmem:[%s5 + $0x68] sm:$0xff]
      %v872 = vld [vmem:[%s5 + $0x70] sm:$0xff]
      %v873 = vld [vmem:[%s5 + $0x78] sm:$0xff]
      %v874 = vld [vmem:[%s5 + $0x80] sm:$0xff]
      %v875 = vld [vmem:[%s5 + $0x88] sm:$0xff]
      %v876 = vld [vmem:[%s5 + $0x90] sm:$0xff]
      %v877 = vld [vmem:[%s5 + $0x98] sm:$0xff]
      %v878 = vld [vmem:[%s5 + $0xa0] sm:$0xff]
      %v879 = vld [vmem:[%s5 + $0xa8] sm:$0xff]
      %v880 = vld [vmem:[%s5 + $0xb0] sm:$0xff]
      %v881 = vld [vmem:[%s5 + $0xb8] sm:$0xff]
      %v882 = vld [vmem:[%s5 + $0xc0] sm:$0xff]
      %v883 = vld [vmem:[%s5 + $0xc8] sm:$0xff]
      %v884 = vld [vmem:[%s5 + $0xd0] sm:$0xff]
      %v885 = vld [vmem:[%s5 + $0xd8] sm:$0xff]
      %v886 = vld [vmem:[%s5 + $0xe0] sm:$0xff]
      %v887 = vld [vmem:[%s5 + $0xe8] sm:$0xff]
      %v888 = vld [vmem:[%s5 + $0xf0] sm:$0xff]
      %v889 = vld [vmem:[%s5 + $0xf8] sm:$0xff]
      %v890 = vpack.c.bf16 %v675, %v674
      %v891 = vpack.c.bf16 %v677, %v676
      %v892 = vpack.c.bf16 %v679, %v678
      %v893 = vpack.c.bf16 %v681, %v680
      %v894 = vpack.c.bf16 %v693, %v691
      %v895 = vpack.c.bf16 %v697, %v695
      %v896 = vpack.c.bf16 %v701, %v699
      %v897 = vpack.c.bf16 %v705, %v703
      %v898 = vpack.c.bf16 %v717, %v715
      %v899 = vpack.c.bf16 %v721, %v719
      %v900 = vpack.c.bf16 %v725, %v723
      %v901 = vpack.c.bf16 %v729, %v727
      %v902 = vpack.c.bf16 %v741, %v739
      %v903 = vpack.c.bf16 %v745, %v743
      %v904 = vpack.c.bf16 %v749, %v747
      %v905 = vpack.c.bf16 %v753, %v751
      %v906 = vpack.c.bf16 %v765, %v763
      %v907 = vpack.c.bf16 %v769, %v767
      %v908 = vpack.c.bf16 %v773, %v771
      %v909 = vpack.c.bf16 %v777, %v775
      %v910 = vpack.c.bf16 %v789, %v787
      %v911 = vpack.c.bf16 %v793, %v791
      %v912 = vpack.c.bf16 %v797, %v795
      %v913 = vpack.c.bf16 %v801, %v799
      %v914 = vpack.c.bf16 %v813, %v811
      %v915 = vpack.c.bf16 %v817, %v815
      %v916 = vpack.c.bf16 %v821, %v819
      %v917 = vpack.c.bf16 %v825, %v823
      %v918 = vpack.c.bf16 %v837, %v835
      %v919 = vpack.c.bf16 %v841, %v839
      %v920 = vpack.c.bf16 %v845, %v843
      %v921 = vpack.c.bf16 %v849, %v847
      %v922 = vld [vmem:[%s6] sm:$0xff]
      %v923 = vld [vmem:[%s6 + $0x8] sm:$0xff]
      %v924 = vld [vmem:[%s6 + $0x10] sm:$0xff]
      %v925 = vld [vmem:[%s6 + $0x18] sm:$0xff]
      %v926 = vld [vmem:[%s6 + $0x20] sm:$0xff]
      %v927 = vld [vmem:[%s6 + $0x28] sm:$0xff]
      %v928 = vld [vmem:[%s6 + $0x30] sm:$0xff]
      %v929 = vld [vmem:[%s6 + $0x38] sm:$0xff]
      %v930 = vld [vmem:[%s6 + $0x40] sm:$0xff]
      %v931 = vld [vmem:[%s6 + $0x48] sm:$0xff]
      %v932 = vld [vmem:[%s6 + $0x50] sm:$0xff]
      %v933 = vld [vmem:[%s6 + $0x58] sm:$0xff]
      %v934 = vld [vmem:[%s6 + $0x60] sm:$0xff]
      %v935 = vld [vmem:[%s6 + $0x68] sm:$0xff]
      %v936 = vld [vmem:[%s6 + $0x70] sm:$0xff]
      %v937 = vld [vmem:[%s6 + $0x78] sm:$0xff]
      %939 = vset.pattern.permute.xlu0 0
      %940 = vperm.xlu0 %939, %v922
      %v941 = vpop.permute.xlu0 %940
      %944 = vset.pattern.permute.xlu0 0
      %945 = vperm.xlu0 %944, %v923
      %v946 = vpop.permute.xlu0 %945
      %949 = vset.pattern.permute.xlu0 0
      %950 = vperm.xlu0 %949, %v924
      %v951 = vpop.permute.xlu0 %950
      %954 = vset.pattern.permute.xlu0 0
      %955 = vperm.xlu0 %954, %v925
      %v956 = vpop.permute.xlu0 %955
      %959 = vset.pattern.permute.xlu0 0
      %960 = vperm.xlu0 %959, %v926
      %v961 = vpop.permute.xlu0 %960
      %964 = vset.pattern.permute.xlu0 0
      %965 = vperm.xlu0 %964, %v927
      %v966 = vpop.permute.xlu0 %965
      %969 = vset.pattern.permute.xlu0 0
      %970 = vperm.xlu0 %969, %v928
      %v971 = vpop.permute.xlu0 %970
      %974 = vset.pattern.permute.xlu0 0
      %975 = vperm.xlu0 %974, %v929
      %v976 = vpop.permute.xlu0 %975
      %979 = vset.pattern.permute.xlu0 0
      %980 = vperm.xlu0 %979, %v930
      %v981 = vpop.permute.xlu0 %980
      %984 = vset.pattern.permute.xlu0 0
      %985 = vperm.xlu0 %984, %v931
      %v986 = vpop.permute.xlu0 %985
      %989 = vset.pattern.permute.xlu0 0
      %990 = vperm.xlu0 %989, %v932
      %v991 = vpop.permute.xlu0 %990
      %994 = vset.pattern.permute.xlu0 0
      %995 = vperm.xlu0 %994, %v933
      %v996 = vpop.permute.xlu0 %995
      %999 = vset.pattern.permute.xlu0 0
      %1000 = vperm.xlu0 %999, %v934
      %v1001 = vpop.permute.xlu0 %1000
      %1004 = vset.pattern.permute.xlu0 0
      %1005 = vperm.xlu0 %1004, %v935
      %v1006 = vpop.permute.xlu0 %1005
      %1009 = vset.pattern.permute.xlu0 0
      %1010 = vperm.xlu0 %1009, %v936
      %v1011 = vpop.permute.xlu0 %1010
      %1014 = vset.pattern.permute.xlu0 0
      %1015 = vperm.xlu0 %1014, %v937
      %v1016 = vpop.permute.xlu0 %1015
      %v1050 = vunpack.c.l.b16 %v858
      %v1051 = vunpack.c.h.b16 %v858
      %v1052 = vunpack.c.l.b16 %v859
      %v1053 = vunpack.c.h.b16 %v859
      %v1054 = vunpack.c.l.b16 %v860
      %v1055 = vunpack.c.h.b16 %v860
      %v1056 = vunpack.c.l.b16 %v861
      %v1057 = vunpack.c.h.b16 %v861
      %v1058 = vunpack.c.l.b16 %v862
      %v1059 = vunpack.c.h.b16 %v862
      %v1060 = vunpack.c.l.b16 %v863
      %v1061 = vunpack.c.h.b16 %v863
      %v1062 = vunpack.c.l.b16 %v864
      %v1063 = vunpack.c.h.b16 %v864
      %v1064 = vunpack.c.l.b16 %v865
      %v1065 = vunpack.c.h.b16 %v865
      %v1066 = vunpack.c.l.b16 %v866
      %v1067 = vunpack.c.h.b16 %v866
      %v1068 = vunpack.c.l.b16 %v867
      %v1069 = vunpack.c.h.b16 %v867
      %v1070 = vunpack.c.l.b16 %v868
      %v1071 = vunpack.c.h.b16 %v868
      %v1072 = vunpack.c.l.b16 %v869
      %v1073 = vunpack.c.h.b16 %v869
      %v1074 = vunpack.c.l.b16 %v870
      %v1075 = vunpack.c.h.b16 %v870
      %v1076 = vunpack.c.l.b16 %v871
      %v1077 = vunpack.c.h.b16 %v871
      %v1078 = vunpack.c.l.b16 %v872
      %v1079 = vunpack.c.h.b16 %v872
      %v1080 = vunpack.c.l.b16 %v873
      %v1081 = vunpack.c.h.b16 %v873
      %v1082 = vunpack.c.l.b16 %v874
      %v1083 = vunpack.c.h.b16 %v874
      %v1084 = vunpack.c.l.b16 %v875
      %v1085 = vunpack.c.h.b16 %v875
      %v1086 = vunpack.c.l.b16 %v876
      %v1087 = vunpack.c.h.b16 %v876
      %v1088 = vunpack.c.l.b16 %v877
      %v1089 = vunpack.c.h.b16 %v877
      %v1090 = vunpack.c.l.b16 %v878
      %v1091 = vunpack.c.h.b16 %v878
      %v1092 = vunpack.c.l.b16 %v879
      %v1093 = vunpack.c.h.b16 %v879
      %v1094 = vunpack.c.l.b16 %v880
      %v1095 = vunpack.c.h.b16 %v880
      %v1096 = vunpack.c.l.b16 %v881
      %v1097 = vunpack.c.h.b16 %v881
      %v1098 = vunpack.c.l.b16 %v882
      %v1099 = vunpack.c.h.b16 %v882
      %v1100 = vunpack.c.l.b16 %v883
      %v1101 = vunpack.c.h.b16 %v883
      %v1102 = vunpack.c.l.b16 %v884
      %v1103 = vunpack.c.h.b16 %v884
      %v1104 = vunpack.c.l.b16 %v885
      %v1105 = vunpack.c.h.b16 %v885
      %v1106 = vunpack.c.l.b16 %v886
      %v1107 = vunpack.c.h.b16 %v886
      %v1108 = vunpack.c.l.b16 %v887
      %v1109 = vunpack.c.h.b16 %v887
      %v1110 = vunpack.c.l.b16 %v888
      %v1111 = vunpack.c.h.b16 %v888
      %v1112 = vunpack.c.l.b16 %v889
      %v1113 = vunpack.c.h.b16 %v889
      %v1114 = vpack.c.b16 %v1054, %v1050
      %v1115 = vpack.c.b16 %v1055, %v1051
      %v1116 = vpack.c.b16 %v1056, %v1052
      %v1117 = vpack.c.b16 %v1057, %v1053
      %v1118 = vpack.c.b16 %v1062, %v1058
      %v1119 = vpack.c.b16 %v1063, %v1059
      %v1120 = vpack.c.b16 %v1064, %v1060
      %v1121 = vpack.c.b16 %v1065, %v1061
      %v1122 = vpack.c.b16 %v1070, %v1066
      %v1123 = vpack.c.b16 %v1071, %v1067
      %v1124 = vpack.c.b16 %v1072, %v1068
      %v1125 = vpack.c.b16 %v1073, %v1069
      %v1126 = vpack.c.b16 %v1078, %v1074
      %v1127 = vpack.c.b16 %v1079, %v1075
      %v1128 = vpack.c.b16 %v1080, %v1076
      %v1129 = vpack.c.b16 %v1081, %v1077
      %v1130 = vpack.c.b16 %v1086, %v1082
      %v1131 = vpack.c.b16 %v1087, %v1083
      %v1132 = vpack.c.b16 %v1088, %v1084
      %v1133 = vpack.c.b16 %v1089, %v1085
      %v1134 = vpack.c.b16 %v1094, %v1090
      %v1135 = vpack.c.b16 %v1095, %v1091
      %v1136 = vpack.c.b16 %v1096, %v1092
      %v1137 = vpack.c.b16 %v1097, %v1093
      %v1138 = vpack.c.b16 %v1102, %v1098
      %v1139 = vpack.c.b16 %v1103, %v1099
      %v1140 = vpack.c.b16 %v1104, %v1100
      %v1141 = vpack.c.b16 %v1105, %v1101
      %v1142 = vpack.c.b16 %v1110, %v1106
      %v1143 = vpack.c.b16 %v1111, %v1107
      %v1144 = vpack.c.b16 %v1112, %v1108
      %v1145 = vpack.c.b16 %v1113, %v1109
      %1178 = vmatpush.bf16.msra.mxu0 %v897
      %1179 = vmatpush.bf16.msra.mxu0 %v896
      %1180 = vmatpush.bf16.msra.mxu0 %v895
      %1181 = vmatpush.bf16.msra.mxu0 %v894
      %1182 = vmatpush.bf16.msra.mxu0 %v893
      %1183 = vmatpush.bf16.msra.mxu0 %v892
      %1184 = vmatpush.bf16.msra.mxu0 %v891
      %1185 = vmatpush.bf16.msra.mxu0 %v890
      %1186 = vmatmul.bf16.gmra.mxu0 %v1114
      %v1187 = vpop.f32.mrf.mxu0
      %v1188 = vadd.f32 %v941, %v1187
      %v1189 = vpop.f32.mrf.mxu0
      %v1190 = vadd.f32 %v946, %v1189
      %1191 = vmatmul.bf16.gmra.mxu0 %v1118
      %v1192 = vpop.f32.mrf.mxu0
      %v1193 = vadd.f32 %v951, %v1192
      %v1194 = vpop.f32.mrf.mxu0
      %v1195 = vadd.f32 %v956, %v1194
      %1196 = vmatmul.bf16.gmra.mxu0 %v1122
      %v1197 = vpop.f32.mrf.mxu0
      %v1198 = vadd.f32 %v961, %v1197
      %v1199 = vpop.f32.mrf.mxu0
      %v1200 = vadd.f32 %v966, %v1199
      %1201 = vmatmul.bf16.gmra.mxu0 %v1126
      %v1202 = vpop.f32.mrf.mxu0
      %v1203 = vadd.f32 %v971, %v1202
      %v1204 = vpop.f32.mrf.mxu0
      %v1205 = vadd.f32 %v976, %v1204
      %1206 = vmatmul.bf16.gmra.mxu0 %v1130
      %v1207 = vpop.f32.mrf.mxu0
      %v1208 = vadd.f32 %v981, %v1207
      %v1209 = vpop.f32.mrf.mxu0
      %v1210 = vadd.f32 %v986, %v1209
      %1211 = vmatmul.bf16.gmra.mxu0 %v1134
      %v1212 = vpop.f32.mrf.mxu0
      %v1213 = vadd.f32 %v991, %v1212
      %v1214 = vpop.f32.mrf.mxu0
      %v1215 = vadd.f32 %v996, %v1214
      %1216 = vmatmul.bf16.gmra.mxu0 %v1138
      %v1217 = vpop.f32.mrf.mxu0
      %v1218 = vadd.f32 %v1001, %v1217
      %v1219 = vpop.f32.mrf.mxu0
      %v1220 = vadd.f32 %v1006, %v1219
      %1221 = vmatmul.bf16.gmra.mxu0 %v1142
      %v1222 = vpop.f32.mrf.mxu0
      %v1223 = vadd.f32 %v1011, %v1222
      %v1224 = vpop.f32.mrf.mxu0
      %v1225 = vadd.f32 %v1016, %v1224
      %1226 = vdwg.mxu0
      %1227 = vmatpush.bf16.msra.mxu0 %v905
      %1228 = vmatpush.bf16.msra.mxu0 %v904
      %1229 = vmatpush.bf16.msra.mxu0 %v903
      %1230 = vmatpush.bf16.msra.mxu0 %v902
      %1231 = vmatpush.bf16.msra.mxu0 %v901
      %1232 = vmatpush.bf16.msra.mxu0 %v900
      %1233 = vmatpush.bf16.msra.mxu0 %v899
      %1234 = vmatpush.bf16.msra.mxu0 %v898
      %1235 = vmatmul.bf16.gmra.mxu0 %v1115
      %v1236 = vpop.f32.mrf.mxu0
      %v1237 = vadd.f32 %v1188, %v1236
      %v1238 = vpop.f32.mrf.mxu0
      %v1239 = vadd.f32 %v1190, %v1238
      %1240 = vmatmul.bf16.gmra.mxu0 %v1119
      %v1241 = vpop.f32.mrf.mxu0
      %v1242 = vadd.f32 %v1193, %v1241
      %v1243 = vpop.f32.mrf.mxu0
      %v1244 = vadd.f32 %v1195, %v1243
      %1245 = vmatmul.bf16.gmra.mxu0 %v1123
      %v1246 = vpop.f32.mrf.mxu0
      %v1247 = vadd.f32 %v1198, %v1246
      %v1248 = vpop.f32.mrf.mxu0
      %v1249 = vadd.f32 %v1200, %v1248
      %1250 = vmatmul.bf16.gmra.mxu0 %v1127
      %v1251 = vpop.f32.mrf.mxu0
      %v1252 = vadd.f32 %v1203, %v1251
      %v1253 = vpop.f32.mrf.mxu0
      %v1254 = vadd.f32 %v1205, %v1253
      %1255 = vmatmul.bf16.gmra.mxu0 %v1131
      %v1256 = vpop.f32.mrf.mxu0
      %v1257 = vadd.f32 %v1208, %v1256
      %v1258 = vpop.f32.mrf.mxu0
      %v1259 = vadd.f32 %v1210, %v1258
      %1260 = vmatmul.bf16.gmra.mxu0 %v1135
      %v1261 = vpop.f32.mrf.mxu0
      %v1262 = vadd.f32 %v1213, %v1261
      %v1263 = vpop.f32.mrf.mxu0
      %v1264 = vadd.f32 %v1215, %v1263
      %1265 = vmatmul.bf16.gmra.mxu0 %v1139
      %v1266 = vpop.f32.mrf.mxu0
      %v1267 = vadd.f32 %v1218, %v1266
      %v1268 = vpop.f32.mrf.mxu0
      %v1269 = vadd.f32 %v1220, %v1268
      %1270 = vmatmul.bf16.gmra.mxu0 %v1143
      %v1271 = vpop.f32.mrf.mxu0
      %v1272 = vadd.f32 %v1223, %v1271
      %v1273 = vpop.f32.mrf.mxu0
      %v1274 = vadd.f32 %v1225, %v1273
      %1275 = vdwg.mxu0
      %1276 = vmatpush.bf16.msra.mxu0 %v913
      %1277 = vmatpush.bf16.msra.mxu0 %v912
      %1278 = vmatpush.bf16.msra.mxu0 %v911
      %1279 = vmatpush.bf16.msra.mxu0 %v910
      %1280 = vmatpush.bf16.msra.mxu0 %v909
      %1281 = vmatpush.bf16.msra.mxu0 %v908
      %1282 = vmatpush.bf16.msra.mxu0 %v907
      %1283 = vmatpush.bf16.msra.mxu0 %v906
      %1284 = vmatmul.bf16.gmra.mxu0 %v1116
      %v1285 = vpop.f32.mrf.mxu0
      %v1286 = vadd.f32 %v1237, %v1285
      %v1287 = vpop.f32.mrf.mxu0
      %v1288 = vadd.f32 %v1239, %v1287
      %1289 = vmatmul.bf16.gmra.mxu0 %v1120
      %v1290 = vpop.f32.mrf.mxu0
      %v1291 = vadd.f32 %v1242, %v1290
      %v1292 = vpop.f32.mrf.mxu0
      %v1293 = vadd.f32 %v1244, %v1292
      %1294 = vmatmul.bf16.gmra.mxu0 %v1124
      %v1295 = vpop.f32.mrf.mxu0
      %v1296 = vadd.f32 %v1247, %v1295
      %v1297 = vpop.f32.mrf.mxu0
      %v1298 = vadd.f32 %v1249, %v1297
      %1299 = vmatmul.bf16.gmra.mxu0 %v1128
      %v1300 = vpop.f32.mrf.mxu0
      %v1301 = vadd.f32 %v1252, %v1300
      %v1302 = vpop.f32.mrf.mxu0
      %v1303 = vadd.f32 %v1254, %v1302
      %1304 = vmatmul.bf16.gmra.mxu0 %v1132
      %v1305 = vpop.f32.mrf.mxu0
      %v1306 = vadd.f32 %v1257, %v1305
      %v1307 = vpop.f32.mrf.mxu0
      %v1308 = vadd.f32 %v1259, %v1307
      %1309 = vmatmul.bf16.gmra.mxu0 %v1136
      %v1310 = vpop.f32.mrf.mxu0
      %v1311 = vadd.f32 %v1262, %v1310
      %v1312 = vpop.f32.mrf.mxu0
      %v1313 = vadd.f32 %v1264, %v1312
      %1314 = vmatmul.bf16.gmra.mxu0 %v1140
      %v1315 = vpop.f32.mrf.mxu0
      %v1316 = vadd.f32 %v1267, %v1315
      %v1317 = vpop.f32.mrf.mxu0
      %v1318 = vadd.f32 %v1269, %v1317
      %1319 = vmatmul.bf16.gmra.mxu0 %v1144
      %v1320 = vpop.f32.mrf.mxu0
      %v1321 = vadd.f32 %v1272, %v1320
      %v1322 = vpop.f32.mrf.mxu0
      %v1323 = vadd.f32 %v1274, %v1322
      %1324 = vdwg.mxu0
      %1325 = vmatpush.bf16.msra.mxu0 %v921
      %1326 = vmatpush.bf16.msra.mxu0 %v920
      %1327 = vmatpush.bf16.msra.mxu0 %v919
      %1328 = vmatpush.bf16.msra.mxu0 %v918
      %1329 = vmatpush.bf16.msra.mxu0 %v917
      %1330 = vmatpush.bf16.msra.mxu0 %v916
      %1331 = vmatpush.bf16.msra.mxu0 %v915
      %1332 = vmatpush.bf16.msra.mxu0 %v914
      %1333 = vmatmul.bf16.gmra.mxu0 %v1117
      %v1334 = vpop.f32.mrf.mxu0
      %v1335 = vadd.f32 %v1286, %v1334
      %v1336 = vpop.f32.mrf.mxu0
      %v1337 = vadd.f32 %v1288, %v1336
      %1338 = vmatmul.bf16.gmra.mxu0 %v1121
      %v1339 = vpop.f32.mrf.mxu0
      %v1340 = vadd.f32 %v1291, %v1339
      %v1341 = vpop.f32.mrf.mxu0
      %v1342 = vadd.f32 %v1293, %v1341
      %1343 = vmatmul.bf16.gmra.mxu0 %v1125
      %v1344 = vpop.f32.mrf.mxu0
      %v1345 = vadd.f32 %v1296, %v1344
      %v1346 = vpop.f32.mrf.mxu0
      %v1347 = vadd.f32 %v1298, %v1346
      %1348 = vmatmul.bf16.gmra.mxu0 %v1129
      %v1349 = vpop.f32.mrf.mxu0
      %v1350 = vadd.f32 %v1301, %v1349
      %v1351 = vpop.f32.mrf.mxu0
      %v1352 = vadd.f32 %v1303, %v1351
      %1353 = vmatmul.bf16.gmra.mxu0 %v1133
      %v1354 = vpop.f32.mrf.mxu0
      %v1355 = vadd.f32 %v1306, %v1354
      %v1356 = vpop.f32.mrf.mxu0
      %v1357 = vadd.f32 %v1308, %v1356
      %1358 = vmatmul.bf16.gmra.mxu0 %v1137
      %v1359 = vpop.f32.mrf.mxu0
      %v1360 = vadd.f32 %v1311, %v1359
      %v1361 = vpop.f32.mrf.mxu0
      %v1362 = vadd.f32 %v1313, %v1361
      %1363 = vmatmul.bf16.gmra.mxu0 %v1141
      %v1364 = vpop.f32.mrf.mxu0
      %v1365 = vadd.f32 %v1316, %v1364
      %v1366 = vpop.f32.mrf.mxu0
      %v1367 = vadd.f32 %v1318, %v1366
      %1368 = vmatmul.bf16.gmra.mxu0 %v1145
      %v1369 = vpop.f32.mrf.mxu0
      %v1370 = vadd.f32 %v1321, %v1369
      %v1371 = vpop.f32.mrf.mxu0
      %v1372 = vadd.f32 %v1323, %v1371
      %1373 = vdwg.mxu0
      %v1374 = vmax.f32 %v1335, 0.0
      %v1375 = vmax.f32 %v1337, 0.0
      %v1376 = vmax.f32 %v1340, 0.0
      %v1377 = vmax.f32 %v1342, 0.0
      %v1378 = vmax.f32 %v1345, 0.0
      %v1379 = vmax.f32 %v1347, 0.0
      %v1380 = vmax.f32 %v1350, 0.0
      %v1381 = vmax.f32 %v1352, 0.0
      %v1382 = vmax.f32 %v1355, 0.0
      %v1383 = vmax.f32 %v1357, 0.0
      %v1384 = vmax.f32 %v1360, 0.0
      %v1385 = vmax.f32 %v1362, 0.0
      %v1386 = vmax.f32 %v1365, 0.0
      %v1387 = vmax.f32 %v1367, 0.0
      %v1388 = vmax.f32 %v1370, 0.0
      %v1389 = vmax.f32 %v1372, 0.0
      %vm1390 = vcmask 154624
      %v1391 = vsel %vm1390, %v1374, -inf
      %1392 = vmax.xlane.f32.xlu0 %v1391
      %v1393 = vpop.xlane.xlu0 %1392
      %v1394 = vsel %vm1390, %v1375, -inf
      %1395 = vmax.xlane.f32.xlu0 %v1394
      %v1396 = vpop.xlane.xlu0 %1395
      %v1397 = vsel %vm1390, %v1376, -inf
      %1398 = vmax.xlane.f32.xlu0 %v1397
      %v1399 = vpop.xlane.xlu0 %1398
      %v1400 = vsel %vm1390, %v1377, -inf
      %1401 = vmax.xlane.f32.xlu0 %v1400
      %v1402 = vpop.xlane.xlu0 %1401
      %v1403 = vsel %vm1390, %v1378, -inf
      %1404 = vmax.xlane.f32.xlu0 %v1403
      %v1405 = vpop.xlane.xlu0 %1404
      %v1406 = vsel %vm1390, %v1379, -inf
      %1407 = vmax.xlane.f32.xlu0 %v1406
      %v1408 = vpop.xlane.xlu0 %1407
      %v1409 = vsel %vm1390, %v1380, -inf
      %1410 = vmax.xlane.f32.xlu0 %v1409
      %v1411 = vpop.xlane.xlu0 %1410
      %v1412 = vsel %vm1390, %v1381, -inf
      %1413 = vmax.xlane.f32.xlu0 %v1412
      %v1414 = vpop.xlane.xlu0 %1413
      %v1415 = vsel %vm1390, %v1382, -inf
      %1416 = vmax.xlane.f32.xlu0 %v1415
      %v1417 = vpop.xlane.xlu0 %1416
      %v1418 = vsel %vm1390, %v1383, -inf
      %1419 = vmax.xlane.f32.xlu0 %v1418
      %v1420 = vpop.xlane.xlu0 %1419
      %v1421 = vsel %vm1390, %v1384, -inf
      %1422 = vmax.xlane.f32.xlu0 %v1421
      %v1423 = vpop.xlane.xlu0 %1422
      %v1424 = vsel %vm1390, %v1385, -inf
      %1425 = vmax.xlane.f32.xlu0 %v1424
      %v1426 = vpop.xlane.xlu0 %1425
      %v1427 = vsel %vm1390, %v1386, -inf
      %1428 = vmax.xlane.f32.xlu0 %v1427
      %v1429 = vpop.xlane.xlu0 %1428
      %v1430 = vsel %vm1390, %v1387, -inf
      %1431 = vmax.xlane.f32.xlu0 %v1430
      %v1432 = vpop.xlane.xlu0 %1431
      %v1433 = vsel %vm1390, %v1388, -inf
      %1434 = vmax.xlane.f32.xlu0 %v1433
      %v1435 = vpop.xlane.xlu0 %1434
      %v1436 = vsel %vm1390, %v1389, -inf
      %1437 = vmax.xlane.f32.xlu0 %v1436
      %v1438 = vpop.xlane.xlu0 %1437
      %v1455 = vlaneseq
      %v1456 = vand.u32 %v1455, 127
      %v1457 = vperm.slane %v1393, %v1456
      %v1458 = vadd.s32 %v1456, 4294967288
      %v1459 = vperm.slane %v1396, %v1458
      %vm1460 = vcmask 130112
      %v1461 = vsel %vm1460, %v1459, %v1457
      %v1462 = vadd.s32 %v1456, 4294967280
      %v1463 = vperm.slane %v1399, %v1462
      %vm1464 = vcmask 195712
      %v1465 = vsel %vm1464, %v1463, %v1461
      %v1466 = vadd.s32 %v1456, 4294967272
      %v1467 = vperm.slane %v1402, %v1466
      %vm1468 = vcmask 261312
      %v1469 = vsel %vm1468, %v1467, %v1465
      %v1470 = vadd.s32 %v1456, 4294967264
      %v1471 = vperm.slane %v1405, %v1470
      %vm1472 = vcmask 326912
      %v1473 = vsel %vm1472, %v1471, %v1469
      %v1474 = vadd.s32 %v1456, 4294967256
      %v1475 = vperm.slane %v1408, %v1474
      %vm1476 = vcmask 392512
      %v1477 = vsel %vm1476, %v1475, %v1473
      %v1478 = vadd.s32 %v1456, 4294967248
      %v1479 = vperm.slane %v1411, %v1478
      %vm1480 = vcmask 458112
      %v1481 = vsel %vm1480, %v1479, %v1477
      %v1482 = vadd.s32 %v1456, 4294967240
      %v1483 = vperm.slane %v1414, %v1482
      %vm1484 = vcmask 523712
      %v1485 = vsel %vm1484, %v1483, %v1481
      %v1486 = vadd.s32 %v1456, 4294967232
      %v1487 = vperm.slane %v1417, %v1486
      %vm1488 = vcmask 589312
      %v1489 = vsel %vm1488, %v1487, %v1485
      %v1490 = vadd.s32 %v1456, 4294967224
      %v1491 = vperm.slane %v1420, %v1490
      %vm1492 = vcmask 654912
      %v1493 = vsel %vm1492, %v1491, %v1489
      %v1494 = vadd.s32 %v1456, 4294967216
      %v1495 = vperm.slane %v1423, %v1494
      %vm1496 = vcmask 720512
      %v1497 = vsel %vm1496, %v1495, %v1493
      %v1498 = vadd.s32 %v1456, 4294967208
      %v1499 = vperm.slane %v1426, %v1498
      %vm1500 = vcmask 786112
      %v1501 = vsel %vm1500, %v1499, %v1497
      %v1502 = vadd.s32 %v1456, 4294967200
      %v1503 = vperm.slane %v1429, %v1502
      %vm1504 = vcmask 851712
      %v1505 = vsel %vm1504, %v1503, %v1501
      %v1506 = vadd.s32 %v1456, 4294967192
      %v1507 = vperm.slane %v1432, %v1506
      %vm1508 = vcmask 917312
      %v1509 = vsel %vm1508, %v1507, %v1505
      %v1510 = vadd.s32 %v1456, 4294967184
      %v1511 = vperm.slane %v1435, %v1510
      %vm1512 = vcmask 982912
      %v1513 = vsel %vm1512, %v1511, %v1509
      %v1514 = vadd.s32 %v1456, 4294967176
      %v1515 = vperm.slane %v1438, %v1514
      %vm1516 = vcmask 1048512
      %v1517 = vsel %vm1516, %v1515, %v1513
      %s1519 = scalar_lea.vmem [#allocation5], %s45
      %1520 = vst [vmem:[%s1519] sm:$0x1] %v1517
    $region38: #{tpu_custom_call.1} parent=1 // loop_footer
      %s49 = sadd.s32 1, %s45
    $region39: #{tpu_custom_call.1} parent=1 // loop_footer_branch
      %44 = sbr.rel target = $region35
    $region40: #{tpu_custom_call.1} parent=1 // loop_exit
      _
    // Predicated region
    $region41: #{tpu_custom_call.1} parent=1 // pred_check
      _
    $region42: #{tpu_custom_call.1} parent=1 // pred_check_branch
      %1522 = sbr.rel (0) target = $region44
    $region43: #{tpu_custom_call.1} parent=1 // pred_region
      %1524 = vsyncadd [#allocation4], 0
      %s1526 = sshll.u32 [#allocation5], 4
      %s1527 = int_to_ptr.vmem [resolvable:$true] %s1526
      %s1528 = sshll.u32 %s7, 4
      %s1529 = int_to_ptr.hbm [resolvable:$true] %s1528
      %1531 = dma.vmem_to_hbm [thread:$0]  %s1527, 32, %s1529, [#allocation4]
    $region44: #{tpu_custom_call.1} parent=1 // pred_fallthru
      _
    // Predicated region
    $region45: #{tpu_custom_call.1} parent=1 // pred_check
      _
    $region46: #{tpu_custom_call.1} parent=1 // pred_check_branch
      %1533 = sbr.rel (0) target = $region48
    $region47: #{tpu_custom_call.1} parent=1 // pred_region
      %1535 = dma.done [#allocation4], 32
    $region48: #{tpu_custom_call.1} parent=1 // pred_fallthru
      _
    %1536 = vsyncpa [#allocation3], 1
    %1537 = vsyncpa [#allocation4], 1

</llo_original>
